<compile_context>
chip_gen: v7x
topology: tpu7x:2x2x1
jax: 0.10.0
libtpu: 0.0.40
codegen_flags: <defaults>
</compile_context>

<pallas_src>
import functools

import jax
import jax.numpy as jnp
from jax import lax
from jax.experimental import pallas as pl
from jax.experimental.pallas import tpu as pltpu

EPS = 1e-5  # PyTorch BatchNorm2d default


def _conv_block_kernel(xs_ref, m1_ref, m2_ref, g1_ref, be1_ref, g2_ref, be2_ref,
                       red_ref, out_ref, xpad_ref, ypad_ref, *, inv_nhw):
    N, H, WCin = xs_ref.shape
    WCmid = m1_ref.shape[2]
    WCout = m2_ref.shape[2]
    NH = N * H

    # ---- stage input into dy-halo-padded scratch (one full zero fill, no slivers) ----
    xpad_ref[...] = jnp.zeros_like(xpad_ref)
    xpad_ref[:, 1:H + 1, :] = xs_ref[...]

    # ---- conv1: one lane-dense matmul per ky (kx shift + w padding live in weights) ----
    acc1 = jnp.zeros((NH, WCmid), jnp.float32)
    for ky in range(3):
        xk = xpad_ref[:, ky:ky + H, :].reshape(NH, WCin)
        acc1 = acc1 + jnp.dot(xk, m1_ref[ky], preferred_element_type=jnp.float32)
    # conv bias omitted: cancels exactly against training-mode BN mean subtraction.

    # ---- BN1 (batch stats) + ReLU, fully lane-dense ----
    # red_ref is the 0/1 "sum over w and broadcast back per channel" matrix.
    mean1 = jnp.sum(jnp.dot(acc1, red_ref[...], preferred_element_type=jnp.float32),
                    axis=0, keepdims=True) * inv_nhw
    msq1 = jnp.sum(jnp.dot(acc1 * acc1, red_ref[...], preferred_element_type=jnp.float32),
                   axis=0, keepdims=True) * inv_nhw
    scale1 = g1_ref[...] * lax.rsqrt(msq1 - mean1 * mean1 + EPS)
    shift1 = be1_ref[...] - mean1 * scale1
    y1 = jnp.maximum(acc1 * scale1 + shift1, 0.0)

    # ---- stage y1 into padded scratch for conv2 ----
    ypad_ref[...] = jnp.zeros_like(ypad_ref)
    ypad_ref[:, 1:H + 1, :] = y1.reshape(N, H, WCmid)

    # ---- conv2 ----
    acc2 = jnp.zeros((NH, WCout), jnp.float32)
    for ky in range(3):
        yk = ypad_ref[:, ky:ky + H, :].reshape(NH, WCmid)
        acc2 = acc2 + jnp.dot(yk, m2_ref[ky], preferred_element_type=jnp.float32)

    # ---- BN2 + ReLU, write lane-dense output slab [N*H, W*Cout] ----
    mean2 = jnp.sum(jnp.dot(acc2, red_ref[...], preferred_element_type=jnp.float32),
                    axis=0, keepdims=True) * inv_nhw
    msq2 = jnp.sum(jnp.dot(acc2 * acc2, red_ref[...], preferred_element_type=jnp.float32),
                   axis=0, keepdims=True) * inv_nhw
    scale2 = g2_ref[...] * lax.rsqrt(msq2 - mean2 * mean2 + EPS)
    shift2 = be2_ref[...] - mean2 * scale2
    out_ref[...] = jnp.maximum(acc2 * scale2 + shift2, 0.0)


def _banded_weights(w_oihw, wdim):
    """OIHW 3x3 conv weights -> per-ky banded block matrices [3, W*Ci, W*Co].

    M[ky, w_in*Ci + ci, w_out*Co + co] = w[co, ci, ky, kx] with kx = w_in - w_out + 1
    when 0 <= kx <= 2, else 0.  This folds the kx shift and the w zero-padding into
    the weight so each conv is 3 lane-dense matmuls on the [N*H, W*C] slab.
    """
    co, ci = w_oihw.shape[0], w_oihw.shape[1]
    w = jnp.transpose(w_oihw, (2, 3, 1, 0)).astype(jnp.float32)     # [ky, kx, ci, co]
    idx = jnp.arange(wdim)
    dx = idx[:, None] - idx[None, :] + 1                            # [w_in, w_out]
    valid = ((dx >= 0) & (dx <= 2)).astype(jnp.float32)
    taps = w[:, jnp.clip(dx, 0, 2)]                                 # [ky, w_in, w_out, ci, co]
    taps = taps * valid[None, :, :, None, None]
    taps = jnp.transpose(taps, (0, 1, 3, 2, 4))                     # [ky, w_in, ci, w_out, co]
    return taps.reshape(3, wdim * ci, wdim * co)


def conv_block_pallas(x_nchw, params):
    """x_nchw: [N, Cin, H, W] float32.  Returns [N, Cout, H, W] float32."""
    w1, b1, g1, be1, w2, b2, g2, be2 = params
    del b1, b2  # cancelled exactly by training-mode BatchNorm mean subtraction
    N, Cin, H, W = x_nchw.shape
    Cmid = w1.shape[0]
    Cout = w2.shape[0]
    WCin, WCmid, WCout = W * Cin, W * Cmid, W * Cout
    # NOTE: the output slab is unmasked-lane-dense when W*Cout is a multiple of 128
    # (true for the test shape); other shapes still work but stores become masked.

    # lane-dense activation slab: [N, H, W*Cin]
    xs = jnp.transpose(x_nchw, (0, 2, 3, 1)).reshape(N, H, WCin).astype(jnp.float32)

    # per-ky banded block-diagonal conv weights
    m1 = _banded_weights(w1, W)        # [3, W*Cin,  W*Cmid]
    m2 = _banded_weights(w2, W)        # [3, W*Cmid, W*Cout]

    # BN affine params tiled once to lane-dense [1, W*C] (hoisted out of the kernel)
    g1l = jnp.tile(g1.astype(jnp.float32), W).reshape(1, WCmid)
    be1l = jnp.tile(be1.astype(jnp.float32), W).reshape(1, WCmid)
    g2l = jnp.tile(g2.astype(jnp.float32), W).reshape(1, WCout)
    be2l = jnp.tile(be2.astype(jnp.float32), W).reshape(1, WCout)

    # 0/1 matrix that sums over w and broadcasts per-channel back to every lane
    lane_c = jnp.arange(WCout) % Cout   # Cmid == Cout for ConvBlock
    red = (lane_c[:, None] == lane_c[None, :]).astype(jnp.float32)

    inv_nhw = 1.0 / float(N * H * W)
    kernel = functools.partial(_conv_block_kernel, inv_nhw=inv_nhw)

    args = (xs, m1, m2, g1l, be1l, g2l, be2l, red)

    # size-derived VMEM limit (inputs + output + scratch) with headroom
    buf_bytes = sum(int(a.size) * a.dtype.itemsize for a in args)
    buf_bytes += N * H * WCout * 4                       # output slab
    buf_bytes += N * (H + 2) * (WCin + WCmid) * 4        # padded scratches
    vmem_limit = min(128 * 1024 * 1024, 4 * buf_bytes + (4 << 20))

    vmem = pl.BlockSpec(memory_space=pltpu.MemorySpace.VMEM)
    out_2d = pl.pallas_call(
        kernel,
        out_shape=jax.ShapeDtypeStruct((N * H, WCout), jnp.float32),
        in_specs=[vmem] * len(args),
        out_specs=vmem,
        scratch_shapes=[pltpu.VMEM((N, H + 2, WCin), jnp.float32),
                        pltpu.VMEM((N, H + 2, WCmid), jnp.float32)],
        compiler_params=pltpu.CompilerParams(vmem_limit_bytes=vmem_limit),
    )(*args)

    # untangle the lane-dense slab back to NCHW in the wrapper
    out_nhwc = out_2d.reshape(N, H, W, Cout)
    return jnp.transpose(out_nhwc, (0, 3, 1, 2))


def conv_block_ref(x, params):
    """Pure-JAX reference matching PyTorch ConvBlock forward (training-mode BN)."""
    w1, b1, g1, be1, w2, b2, g2, be2 = params

    def conv(x, w, b):
        y = lax.conv_general_dilated(
            x, w, window_strides=(1, 1), padding=((1, 1), (1, 1)),
            dimension_numbers=('NCHW', 'OIHW', 'NCHW'))
        return y + b[None, :, None, None]

    def bn_relu(x, g, be):
        m = jnp.mean(x, axis=(0, 2, 3), keepdims=True)
        v = jnp.mean((x - m) ** 2, axis=(0, 2, 3), keepdims=True)
        y = g[None, :, None, None] * (x - m) * lax.rsqrt(v + EPS) \
            + be[None, :, None, None]
        return jnp.maximum(y, 0.0)

    y = bn_relu(conv(x, w1, b1), g1, be1)
    y = bn_relu(conv(y, w2, b2), g2, be2)
    return y


def make_params(key, in_channels, out_channels):
    ks = jax.random.split(key, 8)
    w1 = jax.random.normal(ks[0], (out_channels, in_channels, 3, 3), jnp.float32) * 0.1
    b1 = jax.random.normal(ks[1], (out_channels,), jnp.float32) * 0.1
    g1 = 1.0 + 0.1 * jax.random.normal(ks[2], (out_channels,), jnp.float32)
    be1 = 0.1 * jax.random.normal(ks[3], (out_channels,), jnp.float32)
    w2 = jax.random.normal(ks[4], (out_channels, out_channels, 3, 3), jnp.float32) * 0.1
    b2 = jax.random.normal(ks[5], (out_channels,), jnp.float32) * 0.1
    g2 = 1.0 + 0.1 * jax.random.normal(ks[6], (out_channels,), jnp.float32)
    be2 = 0.1 * jax.random.normal(ks[7], (out_channels,), jnp.float32)
    return (w1, b1, g1, be1, w2, b2, g2, be2)


if __name__ == "__main__":
    key = jax.random.PRNGKey(0)
    k_x, k_p = jax.random.split(key)

    N, Cin, Cout, H, W = 2, 4, 8, 16, 16
    x = jax.random.normal(k_x, (N, Cin, H, W), jnp.float32)
    params = make_params(k_p, Cin, Cout)

    out = jax.block_until_ready(conv_block_pallas(x, params))
    ref = jax.block_until_ready(conv_block_ref(x, params))

    assert out.shape == (N, Cout, H, W)
    assert jnp.allclose(out, ref, atol=1e-4, rtol=1e-4), \
        f"max err {jnp.max(jnp.abs(out - ref))}"
    print("KERNEL_OK")
</pallas_src>

<mosaic_0001>
module attributes {stable_mosaic.version = 11 : i64} {
  func.func @_conv_block_kernel(%arg0: memref<2x16x64xf32, #tpu.memory_space<vmem>>, %arg1: memref<3x64x128xf32, #tpu.memory_space<vmem>>, %arg2: memref<3x128x128xf32, #tpu.memory_space<vmem>>, %arg3: memref<1x128xf32, #tpu.memory_space<vmem>>, %arg4: memref<1x128xf32, #tpu.memory_space<vmem>>, %arg5: memref<1x128xf32, #tpu.memory_space<vmem>>, %arg6: memref<1x128xf32, #tpu.memory_space<vmem>>, %arg7: memref<128x128xf32, #tpu.memory_space<vmem>>, %arg8: memref<32x128xf32, #tpu.memory_space<vmem>>, %arg9: memref<2x18x64xf32, #tpu.memory_space<vmem>>, %arg10: memref<2x18x128xf32, #tpu.memory_space<vmem>>) attributes {dimension_semantics = [], scalar_prefetch = 0 : i64, scratch_operands = 2 : i64, tpu.core_type = #tpu.core_type<tc>} {
    %cst = arith.constant 0.000000e+00 : f32
    %0 = vector.broadcast %cst : f32 to vector<2x18x64xf32>
    %c0 = arith.constant 0 : index
    %c0_0 = arith.constant 0 : index
    %c0_1 = arith.constant 0 : index
    %1 = vector.load %arg9[%c0, %c0_0, %c0_1] : memref<2x18x64xf32, #tpu.memory_space<vmem>>, vector<2x18x64xf32>
    tpu.vector_store %arg9[%c0, %c0_0, %c0_1], %0 {strides = array<i32>} : memref<2x18x64xf32, #tpu.memory_space<vmem>>, vector<2x18x64xf32>,
    %c0_2 = arith.constant 0 : index
    %c0_3 = arith.constant 0 : index
    %c0_4 = arith.constant 0 : index
    %2 = vector.load %arg0[%c0_2, %c0_3, %c0_4] : memref<2x16x64xf32, #tpu.memory_space<vmem>>, vector<2x16x64xf32>
    %c0_5 = arith.constant 0 : index
    %c1 = arith.constant 1 : index
    %c0_6 = arith.constant 0 : index
    %3 = vector.load %arg9[%c0_5, %c1, %c0_6] : memref<2x18x64xf32, #tpu.memory_space<vmem>>, vector<2x16x64xf32>
    tpu.vector_store %arg9[%c0_5, %c1, %c0_6], %2 {strides = array<i32>} : memref<2x18x64xf32, #tpu.memory_space<vmem>>, vector<2x16x64xf32>,
    %cst_7 = arith.constant 0.000000e+00 : f32
    %4 = vector.broadcast %cst_7 : f32 to vector<32x128xf32>
    %c0_8 = arith.constant 0 : index
    %c0_9 = arith.constant 0 : index
    %c0_10 = arith.constant 0 : index
    %5 = vector.load %arg9[%c0_8, %c0_9, %c0_10] : memref<2x18x64xf32, #tpu.memory_space<vmem>>, vector<2x16x64xf32>
    %6 = vector.shape_cast %5 : vector<2x16x64xf32> to vector<32x64xf32>
    %c0_11 = arith.constant 0 : index
    %c0_12 = arith.constant 0 : index
    %c0_13 = arith.constant 0 : index
    %7 = vector.load %arg1[%c0_11, %c0_12, %c0_13] : memref<3x64x128xf32, #tpu.memory_space<vmem>>, vector<1x64x128xf32>
    %8 = vector.shape_cast %7 : vector<1x64x128xf32> to vector<64x128xf32>
    %cst_14 = arith.constant dense<0.000000e+00> : vector<32x128xf32>
    %9 = tpu.matmul %6, %8, %cst_14 {dimension_numbers = #tpu.dot_dimension_numbers<[1], [0], [0], [1], [0, 0, 1, 1], [], []>} : vector<32x64xf32>, vector<64x128xf32>, vector<32x128xf32> -> vector<32x128xf32>
    %10 = arith.addf %4, %9 : vector<32x128xf32>
    %c0_15 = arith.constant 0 : index
    %c1_16 = arith.constant 1 : index
    %c0_17 = arith.constant 0 : index
    %11 = vector.load %arg9[%c0_15, %c1_16, %c0_17] : memref<2x18x64xf32, #tpu.memory_space<vmem>>, vector<2x16x64xf32>
    %12 = vector.shape_cast %11 : vector<2x16x64xf32> to vector<32x64xf32>
    %c1_18 = arith.constant 1 : index
    %c0_19 = arith.constant 0 : index
    %c0_20 = arith.constant 0 : index
    %13 = vector.load %arg1[%c1_18, %c0_19, %c0_20] : memref<3x64x128xf32, #tpu.memory_space<vmem>>, vector<1x64x128xf32>
    %14 = vector.shape_cast %13 : vector<1x64x128xf32> to vector<64x128xf32>
    %cst_21 = arith.constant dense<0.000000e+00> : vector<32x128xf32>
    %15 = tpu.matmul %12, %14, %cst_21 {dimension_numbers = #tpu.dot_dimension_numbers<[1], [0], [0], [1], [0, 0, 1, 1], [], []>} : vector<32x64xf32>, vector<64x128xf32>, vector<32x128xf32> -> vector<32x128xf32>
    %16 = arith.addf %10, %15 : vector<32x128xf32>
    %c0_22 = arith.constant 0 : index
    %c2 = arith.constant 2 : index
    %c0_23 = arith.constant 0 : index
    %17 = vector.load %arg9[%c0_22, %c2, %c0_23] : memref<2x18x64xf32, #tpu.memory_space<vmem>>, vector<2x16x64xf32>
    %18 = vector.shape_cast %17 : vector<2x16x64xf32> to vector<32x64xf32>
    %c2_24 = arith.constant 2 : index
    %c0_25 = arith.constant 0 : index
    %c0_26 = arith.constant 0 : index
    %19 = vector.load %arg1[%c2_24, %c0_25, %c0_26] : memref<3x64x128xf32, #tpu.memory_space<vmem>>, vector<1x64x128xf32>
    %20 = vector.shape_cast %19 : vector<1x64x128xf32> to vector<64x128xf32>
    %cst_27 = arith.constant dense<0.000000e+00> : vector<32x128xf32>
    %21 = tpu.matmul %18, %20, %cst_27 {dimension_numbers = #tpu.dot_dimension_numbers<[1], [0], [0], [1], [0, 0, 1, 1], [], []>} : vector<32x64xf32>, vector<64x128xf32>, vector<32x128xf32> -> vector<32x128xf32>
    %22 = arith.addf %16, %21 : vector<32x128xf32>
    %c0_28 = arith.constant 0 : index
    %c0_29 = arith.constant 0 : index
    %23 = vector.load %arg7[%c0_28, %c0_29] : memref<128x128xf32, #tpu.memory_space<vmem>>, vector<128x128xf32>
    %cst_30 = arith.constant dense<0.000000e+00> : vector<32x128xf32>
    %24 = tpu.matmul %22, %23, %cst_30 {dimension_numbers = #tpu.dot_dimension_numbers<[1], [0], [0], [1], [0, 0, 1, 1], [], []>} : vector<32x128xf32>, vector<128x128xf32>, vector<32x128xf32> -> vector<32x128xf32>
    %cst_31 = arith.constant dense<0.000000e+00> : vector<128xf32>
    %25 = vector.multi_reduction <add>, %24, %cst_31 [0] : vector<32x128xf32> to vector<128xf32>
    %26 = vector.shape_cast %25 : vector<128xf32> to vector<1x128xf32>
    %cst_32 = arith.constant 0.001953125 : f32
    %27 = vector.broadcast %cst_32 : f32 to vector<1x128xf32>
    %28 = arith.mulf %26, %27 : vector<1x128xf32>
    %29 = arith.mulf %22, %22 : vector<32x128xf32>
    %c0_33 = arith.constant 0 : index
    %c0_34 = arith.constant 0 : index
    %30 = vector.load %arg7[%c0_33, %c0_34] : memref<128x128xf32, #tpu.memory_space<vmem>>, vector<128x128xf32>
    %cst_35 = arith.constant dense<0.000000e+00> : vector<32x128xf32>
    %31 = tpu.matmul %29, %30, %cst_35 {dimension_numbers = #tpu.dot_dimension_numbers<[1], [0], [0], [1], [0, 0, 1, 1], [], []>} : vector<32x128xf32>, vector<128x128xf32>, vector<32x128xf32> -> vector<32x128xf32>
    %cst_36 = arith.constant dense<0.000000e+00> : vector<128xf32>
    %32 = vector.multi_reduction <add>, %31, %cst_36 [0] : vector<32x128xf32> to vector<128xf32>
    %33 = vector.shape_cast %32 : vector<128xf32> to vector<1x128xf32>
    %cst_37 = arith.constant 0.001953125 : f32
    %34 = vector.broadcast %cst_37 : f32 to vector<1x128xf32>
    %35 = arith.mulf %33, %34 : vector<1x128xf32>
    %c0_38 = arith.constant 0 : index
    %c0_39 = arith.constant 0 : index
    %36 = vector.load %arg3[%c0_38, %c0_39] : memref<1x128xf32, #tpu.memory_space<vmem>>, vector<1x128xf32>
    %37 = arith.mulf %28, %28 : vector<1x128xf32>
    %38 = arith.subf %35, %37 : vector<1x128xf32>
    %cst_40 = arith.constant 9.99999974E-6 : f32
    %39 = vector.broadcast %cst_40 : f32 to vector<1x128xf32>
    %40 = arith.addf %38, %39 : vector<1x128xf32>
    %41 = math.rsqrt %40 : vector<1x128xf32>
    %42 = arith.mulf %36, %41 : vector<1x128xf32>
    %c0_41 = arith.constant 0 : index
    %c0_42 = arith.constant 0 : index
    %43 = vector.load %arg4[%c0_41, %c0_42] : memref<1x128xf32, #tpu.memory_space<vmem>>, vector<1x128xf32>
    %44 = arith.mulf %28, %42 : vector<1x128xf32>
    %45 = arith.subf %43, %44 : vector<1x128xf32>
    %46 = vector.broadcast %42 : vector<1x128xf32> to vector<32x128xf32>
    %47 = arith.mulf %22, %46 : vector<32x128xf32>
    %48 = vector.broadcast %45 : vector<1x128xf32> to vector<32x128xf32>
    %49 = arith.addf %47, %48 : vector<32x128xf32>
    %cst_43 = arith.constant 0.000000e+00 : f32
    %50 = vector.broadcast %cst_43 : f32 to vector<32x128xf32>
    %51 = arith.maximumf %49, %50 : vector<32x128xf32>
    %cst_44 = arith.constant 0.000000e+00 : f32
    %52 = vector.broadcast %cst_44 : f32 to vector<2x18x128xf32>
    %c0_45 = arith.constant 0 : index
    %c0_46 = arith.constant 0 : index
    %c0_47 = arith.constant 0 : index
    %53 = vector.load %arg10[%c0_45, %c0_46, %c0_47] : memref<2x18x128xf32, #tpu.memory_space<vmem>>, vector<2x18x128xf32>
    tpu.vector_store %arg10[%c0_45, %c0_46, %c0_47], %52 {strides = array<i32>} : memref<2x18x128xf32, #tpu.memory_space<vmem>>, vector<2x18x128xf32>,
    %54 = vector.shape_cast %51 : vector<32x128xf32> to vector<2x16x128xf32>
    %c0_48 = arith.constant 0 : index
    %c1_49 = arith.constant 1 : index
    %c0_50 = arith.constant 0 : index
    %55 = vector.load %arg10[%c0_48, %c1_49, %c0_50] : memref<2x18x128xf32, #tpu.memory_space<vmem>>, vector<2x16x128xf32>
    tpu.vector_store %arg10[%c0_48, %c1_49, %c0_50], %54 {strides = array<i32>} : memref<2x18x128xf32, #tpu.memory_space<vmem>>, vector<2x16x128xf32>,
    %cst_51 = arith.constant 0.000000e+00 : f32
    %56 = vector.broadcast %cst_51 : f32 to vector<32x128xf32>
    %c0_52 = arith.constant 0 : index
    %c0_53 = arith.constant 0 : index
    %c0_54 = arith.constant 0 : index
    %57 = vector.load %arg10[%c0_52, %c0_53, %c0_54] : memref<2x18x128xf32, #tpu.memory_space<vmem>>, vector<2x16x128xf32>
    %58 = vector.shape_cast %57 : vector<2x16x128xf32> to vector<32x128xf32>
    %c0_55 = arith.constant 0 : index
    %c0_56 = arith.constant 0 : index
    %c0_57 = arith.constant 0 : index
    %59 = vector.load %arg2[%c0_55, %c0_56, %c0_57] : memref<3x128x128xf32, #tpu.memory_space<vmem>>, vector<1x128x128xf32>
    %60 = vector.shape_cast %59 : vector<1x128x128xf32> to vector<128x128xf32>
    %cst_58 = arith.constant dense<0.000000e+00> : vector<32x128xf32>
    %61 = tpu.matmul %58, %60, %cst_58 {dimension_numbers = #tpu.dot_dimension_numbers<[1], [0], [0], [1], [0, 0, 1, 1], [], []>} : vector<32x128xf32>, vector<128x128xf32>, vector<32x128xf32> -> vector<32x128xf32>
    %62 = arith.addf %56, %61 : vector<32x128xf32>
    %c0_59 = arith.constant 0 : index
    %c1_60 = arith.constant 1 : index
    %c0_61 = arith.constant 0 : index
    %63 = vector.load %arg10[%c0_59, %c1_60, %c0_61] : memref<2x18x128xf32, #tpu.memory_space<vmem>>, vector<2x16x128xf32>
    %64 = vector.shape_cast %63 : vector<2x16x128xf32> to vector<32x128xf32>
    %c1_62 = arith.constant 1 : index
    %c0_63 = arith.constant 0 : index
    %c0_64 = arith.constant 0 : index
    %65 = vector.load %arg2[%c1_62, %c0_63, %c0_64] : memref<3x128x128xf32, #tpu.memory_space<vmem>>, vector<1x128x128xf32>
    %66 = vector.shape_cast %65 : vector<1x128x128xf32> to vector<128x128xf32>
    %cst_65 = arith.constant dense<0.000000e+00> : vector<32x128xf32>
    %67 = tpu.matmul %64, %66, %cst_65 {dimension_numbers = #tpu.dot_dimension_numbers<[1], [0], [0], [1], [0, 0, 1, 1], [], []>} : vector<32x128xf32>, vector<128x128xf32>, vector<32x128xf32> -> vector<32x128xf32>
    %68 = arith.addf %62, %67 : vector<32x128xf32>
    %c0_66 = arith.constant 0 : index
    %c2_67 = arith.constant 2 : index
    %c0_68 = arith.constant 0 : index
    %69 = vector.load %arg10[%c0_66, %c2_67, %c0_68] : memref<2x18x128xf32, #tpu.memory_space<vmem>>, vector<2x16x128xf32>
    %70 = vector.shape_cast %69 : vector<2x16x128xf32> to vector<32x128xf32>
    %c2_69 = arith.constant 2 : index
    %c0_70 = arith.constant 0 : index
    %c0_71 = arith.constant 0 : index
    %71 = vector.load %arg2[%c2_69, %c0_70, %c0_71] : memref<3x128x128xf32, #tpu.memory_space<vmem>>, vector<1x128x128xf32>
    %72 = vector.shape_cast %71 : vector<1x128x128xf32> to vector<128x128xf32>
    %cst_72 = arith.constant dense<0.000000e+00> : vector<32x128xf32>
    %73 = tpu.matmul %70, %72, %cst_72 {dimension_numbers = #tpu.dot_dimension_numbers<[1], [0], [0], [1], [0, 0, 1, 1], [], []>} : vector<32x128xf32>, vector<128x128xf32>, vector<32x128xf32> -> vector<32x128xf32>
    %74 = arith.addf %68, %73 : vector<32x128xf32>
    %c0_73 = arith.constant 0 : index
    %c0_74 = arith.constant 0 : index
    %75 = vector.load %arg7[%c0_73, %c0_74] : memref<128x128xf32, #tpu.memory_space<vmem>>, vector<128x128xf32>
    %cst_75 = arith.constant dense<0.000000e+00> : vector<32x128xf32>
    %76 = tpu.matmul %74, %75, %cst_75 {dimension_numbers = #tpu.dot_dimension_numbers<[1], [0], [0], [1], [0, 0, 1, 1], [], []>} : vector<32x128xf32>, vector<128x128xf32>, vector<32x128xf32> -> vector<32x128xf32>
    %cst_76 = arith.constant dense<0.000000e+00> : vector<128xf32>
    %77 = vector.multi_reduction <add>, %76, %cst_76 [0] : vector<32x128xf32> to vector<128xf32>
    %78 = vector.shape_cast %77 : vector<128xf32> to vector<1x128xf32>
    %cst_77 = arith.constant 0.001953125 : f32
    %79 = vector.broadcast %cst_77 : f32 to vector<1x128xf32>
    %80 = arith.mulf %78, %79 : vector<1x128xf32>
    %81 = arith.mulf %74, %74 : vector<32x128xf32>
    %c0_78 = arith.constant 0 : index
    %c0_79 = arith.constant 0 : index
    %82 = vector.load %arg7[%c0_78, %c0_79] : memref<128x128xf32, #tpu.memory_space<vmem>>, vector<128x128xf32>
    %cst_80 = arith.constant dense<0.000000e+00> : vector<32x128xf32>
    %83 = tpu.matmul %81, %82, %cst_80 {dimension_numbers = #tpu.dot_dimension_numbers<[1], [0], [0], [1], [0, 0, 1, 1], [], []>} : vector<32x128xf32>, vector<128x128xf32>, vector<32x128xf32> -> vector<32x128xf32>
    %cst_81 = arith.constant dense<0.000000e+00> : vector<128xf32>
    %84 = vector.multi_reduction <add>, %83, %cst_81 [0] : vector<32x128xf32> to vector<128xf32>
    %85 = vector.shape_cast %84 : vector<128xf32> to vector<1x128xf32>
    %cst_82 = arith.constant 0.001953125 : f32
    %86 = vector.broadcast %cst_82 : f32 to vector<1x128xf32>
    %87 = arith.mulf %85, %86 : vector<1x128xf32>
    %c0_83 = arith.constant 0 : index
    %c0_84 = arith.constant 0 : index
    %88 = vector.load %arg5[%c0_83, %c0_84] : memref<1x128xf32, #tpu.memory_space<vmem>>, vector<1x128xf32>
    %89 = arith.mulf %80, %80 : vector<1x128xf32>
    %90 = arith.subf %87, %89 : vector<1x128xf32>
    %cst_85 = arith.constant 9.99999974E-6 : f32
    %91 = vector.broadcast %cst_85 : f32 to vector<1x128xf32>
    %92 = arith.addf %90, %91 : vector<1x128xf32>
    %93 = math.rsqrt %92 : vector<1x128xf32>
    %94 = arith.mulf %88, %93 : vector<1x128xf32>
    %c0_86 = arith.constant 0 : index
    %c0_87 = arith.constant 0 : index
    %95 = vector.load %arg6[%c0_86, %c0_87] : memref<1x128xf32, #tpu.memory_space<vmem>>, vector<1x128xf32>
    %96 = arith.mulf %80, %94 : vector<1x128xf32>
    %97 = arith.subf %95, %96 : vector<1x128xf32>
    %98 = vector.broadcast %94 : vector<1x128xf32> to vector<32x128xf32>
    %99 = arith.mulf %74, %98 : vector<32x128xf32>
    %100 = vector.broadcast %97 : vector<1x128xf32> to vector<32x128xf32>
    %101 = arith.addf %99, %100 : vector<32x128xf32>
    %cst_88 = arith.constant 0.000000e+00 : f32
    %102 = vector.broadcast %cst_88 : f32 to vector<32x128xf32>
    %103 = arith.maximumf %101, %102 : vector<32x128xf32>
    %c0_89 = arith.constant 0 : index
    %c0_90 = arith.constant 0 : index
    %104 = vector.load %arg8[%c0_89, %c0_90] : memref<32x128xf32, #tpu.memory_space<vmem>>, vector<32x128xf32>
    tpu.vector_store %arg8[%c0_89, %c0_90], %103 {strides = array<i32>} : memref<32x128xf32, #tpu.memory_space<vmem>>, vector<32x128xf32>,
    return
  }
}

</mosaic_0001>

<llo_original>
// kernel: tpu_custom_call.1
$region0: #{tpu_custom_call.1}
  #allocation0 [shape = 'u32[]', space=smem, size = 0x4, offset = 0x4, fixed_abs, tag = 'smem constant byte address 0x4 - core index']
  #allocation1 [shape = 'u32[144,128]{1,0:T(1,128)}', space=vmem, size = 0x12000, scoped, tag = 'internal scratch']
  #allocation2 [shape = 'f32[2,18,64]{2,1,0:T(8,128)}', space=vmem, size = 0x6000, scoped, tag = 'scratch operand']
  #allocation3 [shape = 'f32[2,18,128]{2,1,0:T(8,128)}', space=vmem, size = 0x6000, scoped, tag = 'scratch operand']
  %s0 = inlined_call_operand.hbm [shape: f32[2,16,64], index: 0, kind: input, shape index: {}]
  %s1 = inlined_call_operand.hbm [shape: f32[3,64,128], index: 1, kind: input, shape index: {}]
  %s2 = inlined_call_operand.hbm [shape: f32[3,128,128], index: 2, kind: input, shape index: {}]
  %s3 = inlined_call_operand.vmem [shape: f32[1,128], index: 3, kind: input, shape index: {}]
  %s4 = inlined_call_operand.vmem [shape: f32[1,128], index: 4, kind: input, shape index: {}]
  %s5 = inlined_call_operand.vmem [shape: f32[1,128], index: 5, kind: input, shape index: {}]
  %s6 = inlined_call_operand.vmem [shape: f32[1,128], index: 6, kind: input, shape index: {}]
  %s7 = inlined_call_operand.hbm [shape: f32[128,128], index: 7, kind: input, shape index: {}]
  %s8 = inlined_call_operand.hbm [shape: f32[32,128], index: 8, kind: output, shape index: {}]
  %s9 = sld [smem:[#allocation0]]
  $region58: #{tpu_custom_call.1} parent=0
    _
  %s11 = ssub.s32 1, %s9
  %s12 = scalar_select 0, %s11, %s9
  $region1: #{tpu_custom_call.1} parent=0
    #allocation4 [shape = 'u8[16384]{0}', space=vmem, size = 0x4000, scoped, tag = 'input window, operand 0, single buffered']
    #allocation5 [shape = 's32[1]{0}', space=sflag, size = 0x4, scoped, tag = 'scoped memory for tpu_custom_call.1']
    #allocation6 [shape = 's32[1]{0}', space=sflag, size = 0x4, scoped, tag = 'scoped memory for tpu_custom_call.1']
    #allocation7 [shape = 'u8[98304]{0}', space=vmem, size = 0x18000, scoped, tag = 'input window, operand 1, single buffered']
    #allocation8 [shape = 's32[1]{0}', space=sflag, size = 0x4, scoped, tag = 'scoped memory for tpu_custom_call.1']
    #allocation9 [shape = 'u8[196608]{0}', space=vmem, size = 0x30000, scoped, tag = 'input window, operand 2, single buffered']
    #allocation10 [shape = 'u8[65536]{0}', space=vmem, size = 0x10000, scoped, tag = 'input window, operand 7, single buffered']
    #allocation11 [shape = 's32[1]{0}', space=sflag, size = 0x4, scoped, tag = 'scoped memory for tpu_custom_call.1']
    #allocation12 [shape = 'u8[16384]{0}', space=vmem, size = 0x4000, scoped, tag = 'output window, operand 0, single buffered']
    %13 = vsyncpa [#allocation5], 0
    %14 = vsyncpa [#allocation8], 0
    %15 = vsyncpa [#allocation11], 0
    %16 = vsyncpa [#allocation6], 0
    // Predicated region
    $region2: #{tpu_custom_call.1} parent=1 // pred_check
      _
    $region3: #{tpu_custom_call.1} parent=1 // pred_check_branch
      %18 = sbr.rel (0) target = $region5
    $region4: #{tpu_custom_call.1} parent=1 // pred_region
      %s20 = ssub.s32 512, 512
      %21 = vsyncadd [#allocation5], %s20
      %s22 = sshll.u32 [#allocation4], 4
      %s23 = int_to_ptr.vmem [resolvable:$true] %s22
      %28 = dma.hbm_to_vmem [thread:$0]  %s0, 512, %s23, [#allocation5], 128, 128, 8
    $region5: #{tpu_custom_call.1} parent=1 // pred_fallthru
      _
    // Predicated region
    $region6: #{tpu_custom_call.1} parent=1 // pred_check
      _
    $region7: #{tpu_custom_call.1} parent=1 // pred_check_branch
      %30 = sbr.rel (0) target = $region9
    $region8: #{tpu_custom_call.1} parent=1 // pred_region
      %s32 = ssub.s32 3072, 3072
      %33 = vsyncadd [#allocation8], %s32
      %s34 = sshll.u32 [#allocation7], 4
      %s35 = int_to_ptr.vmem [resolvable:$true] %s34
      %40 = dma.hbm_to_vmem [thread:$0]  %s1, 3072, %s35, [#allocation8], 128, 128, 8
    $region9: #{tpu_custom_call.1} parent=1 // pred_fallthru
      _
    // Predicated region
    $region10: #{tpu_custom_call.1} parent=1 // pred_check
      _
    $region11: #{tpu_custom_call.1} parent=1 // pred_check_branch
      %42 = sbr.rel (0) target = $region13
    $region12: #{tpu_custom_call.1} parent=1 // pred_region
      %s44 = ssub.s32 6144, 6144
      %45 = vsyncadd [#allocation8], %s44
      %s46 = sshll.u32 [#allocation9], 4
      %s47 = int_to_ptr.vmem [resolvable:$true] %s46
      %52 = dma.hbm_to_vmem [thread:$0]  %s2, 6144, %s47, [#allocation8], 128, 128, 8
    $region13: #{tpu_custom_call.1} parent=1 // pred_fallthru
      _
    // Predicated region
    $region14: #{tpu_custom_call.1} parent=1 // pred_check
      _
    $region15: #{tpu_custom_call.1} parent=1 // pred_check_branch
      %54 = sbr.rel (0) target = $region17
    $region16: #{tpu_custom_call.1} parent=1 // pred_region
      _
    $region17: #{tpu_custom_call.1} parent=1 // pred_fallthru
      _
    // Predicated region
    $region18: #{tpu_custom_call.1} parent=1 // pred_check
      _
    $region19: #{tpu_custom_call.1} parent=1 // pred_check_branch
      %56 = sbr.rel (0) target = $region21
    $region20: #{tpu_custom_call.1} parent=1 // pred_region
      _
    $region21: #{tpu_custom_call.1} parent=1 // pred_fallthru
      _
    // Predicated region
    $region22: #{tpu_custom_call.1} parent=1 // pred_check
      _
    $region23: #{tpu_custom_call.1} parent=1 // pred_check_branch
      %58 = sbr.rel (0) target = $region25
    $region24: #{tpu_custom_call.1} parent=1 // pred_region
      _
    $region25: #{tpu_custom_call.1} parent=1 // pred_fallthru
      _
    // Predicated region
    $region26: #{tpu_custom_call.1} parent=1 // pred_check
      _
    $region27: #{tpu_custom_call.1} parent=1 // pred_check_branch
      %60 = sbr.rel (0) target = $region29
    $region28: #{tpu_custom_call.1} parent=1 // pred_region
      _
    $region29: #{tpu_custom_call.1} parent=1 // pred_fallthru
      _
    // Predicated region
    $region30: #{tpu_custom_call.1} parent=1 // pred_check
      _
    $region31: #{tpu_custom_call.1} parent=1 // pred_check_branch
      %62 = sbr.rel (0) target = $region33
    $region32: #{tpu_custom_call.1} parent=1 // pred_region
      %s64 = ssub.s32 2048, 2048
      %65 = vsyncadd [#allocation11], %s64
      %s66 = sshll.u32 [#allocation10], 4
      %s67 = int_to_ptr.vmem [resolvable:$true] %s66
      %72 = dma.hbm_to_vmem [thread:$0]  %s7, 2048, %s67, [#allocation11], 128, 128, 8
    $region33: #{tpu_custom_call.1} parent=1 // pred_fallthru
      _
    // Predicated region
    $region34: #{tpu_custom_call.1} parent=1 // pred_check
      _
    $region35: #{tpu_custom_call.1} parent=1 // pred_check_branch
      %74 = sbr.rel (0) target = $region37
    $region36: #{tpu_custom_call.1} parent=1 // pred_region
      %75 = dma.done [#allocation5], 512
    $region37: #{tpu_custom_call.1} parent=1 // pred_fallthru
      _
    // Predicated region
    $region38: #{tpu_custom_call.1} parent=1 // pred_check
      _
    $region39: #{tpu_custom_call.1} parent=1 // pred_check_branch
      %77 = sbr.rel (0) target = $region41
    $region40: #{tpu_custom_call.1} parent=1 // pred_region
      %78 = dma.done [#allocation8], 3072
    $region41: #{tpu_custom_call.1} parent=1 // pred_fallthru
      _
    // Predicated region
    $region42: #{tpu_custom_call.1} parent=1 // pred_check
      _
    $region43: #{tpu_custom_call.1} parent=1 // pred_check_branch
      %80 = sbr.rel (0) target = $region45
    $region44: #{tpu_custom_call.1} parent=1 // pred_region
      %81 = dma.done [#allocation8], 6144
    $region45: #{tpu_custom_call.1} parent=1 // pred_fallthru
      _
    // Predicated region
    $region46: #{tpu_custom_call.1} parent=1 // pred_check
      _
    $region47: #{tpu_custom_call.1} parent=1 // pred_check_branch
      %83 = sbr.rel (0) target = $region49
    $region48: #{tpu_custom_call.1} parent=1 // pred_region
      %84 = dma.done [#allocation11], 2048
    $region49: #{tpu_custom_call.1} parent=1 // pred_fallthru
      _
    %vm85 = vcmask 523264
    %86 = vst.msk [vmem:[#allocation2] sm:$0xff] %vm85, 0.0
    %87 = vst.msk [vmem:[#allocation2 + $0x8] sm:$0xff] %vm85, 0.0
    %vm88 = vcmask 517120
    %89 = vst.msk [vmem:[#allocation2 + $0x10] sm:$0x3] %vm88, 0.0
    %90 = vst.msk [vmem:[#allocation2 + $0x18] sm:$0xff] %vm85, 0.0
    %91 = vst.msk [vmem:[#allocation2 + $0x20] sm:$0xff] %vm85, 0.0
    %92 = vst.msk [vmem:[#allocation2 + $0x28] sm:$0x3] %vm88, 0.0
    %v93 = vld [vmem:[#allocation4] sm:$0xff]
    %v94 = vld [vmem:[#allocation4 + $0x8] sm:$0xff]
    %v95 = vld [vmem:[#allocation4 + $0x10] sm:$0xff]
    %v96 = vld [vmem:[#allocation4 + $0x18] sm:$0xff]
    %97 = vst.msk [vmem:[#allocation2 + $0x1] sm:$0xff] %vm85, %v93
    %98 = vst.msk [vmem:[#allocation2 + $0x9] sm:$0xff] %vm85, %v94
    %99 = vst.msk [vmem:[#allocation2 + $0x19] sm:$0xff] %vm85, %v95
    %100 = vst.msk [vmem:[#allocation2 + $0x21] sm:$0xff] %vm85, %v96
    %v101 = vld [vmem:[#allocation2] sm:$0xff]
    %v102 = vld [vmem:[#allocation2 + $0x8] sm:$0xff]
    %v103 = vld [vmem:[#allocation2 + $0x18] sm:$0xff]
    %v104 = vld [vmem:[#allocation2 + $0x20] sm:$0xff]
    %v105 = vld [vmem:[#allocation7] sm:$0xff]
    %v106 = vld [vmem:[#allocation7 + $0x8] sm:$0xff]
    %v107 = vld [vmem:[#allocation7 + $0x10] sm:$0xff]
    %v108 = vld [vmem:[#allocation7 + $0x18] sm:$0xff]
    %v109 = vld [vmem:[#allocation7 + $0x20] sm:$0xff]
    %v110 = vld [vmem:[#allocation7 + $0x28] sm:$0xff]
    %v111 = vld [vmem:[#allocation7 + $0x30] sm:$0xff]
    %v112 = vld [vmem:[#allocation7 + $0x38] sm:$0xff]
    %v113 = vld [vmem:[#allocation2 + $0x1] sm:$0xff]
    %v114 = vld [vmem:[#allocation2 + $0x9] sm:$0xff]
    %v115 = vld [vmem:[#allocation2 + $0x19] sm:$0xff]
    %v116 = vld [vmem:[#allocation2 + $0x21] sm:$0xff]
    %s117 = scalar_lea.vmem [#allocation7], 64
    %v118 = vld [vmem:[%s117] sm:$0xff]
    %v119 = vld [vmem:[%s117 + $0x8] sm:$0xff]
    %v120 = vld [vmem:[%s117 + $0x10] sm:$0xff]
    %v121 = vld [vmem:[%s117 + $0x18] sm:$0xff]
    %v122 = vld [vmem:[%s117 + $0x20] sm:$0xff]
    %v123 = vld [vmem:[%s117 + $0x28] sm:$0xff]
    %v124 = vld [vmem:[%s117 + $0x30] sm:$0xff]
    %v125 = vld [vmem:[%s117 + $0x38] sm:$0xff]
    %v127 = vsel %vm85, %v113, 0
    %v130 = vsel %vm85, %v114, 0
    %v133 = vsel %vm85, %v115, 0
    %v136 = vsel %vm85, %v116, 0
    %138 = vmatprep.subr.mxu0 0.0
    %139 = vmatpush1.msra.mxu0 %v118
    %140 = vmatprep.subr.mxu0 0.0
    %141 = vmatpush1.msra.mxu0 %v119
    %142 = vmatprep.subr.mxu0 0.0
    %143 = vmatpush1.msra.mxu0 %v120
    %144 = vmatprep.subr.mxu0 0.0
    %145 = vmatpush1.msra.mxu0 %v121
    %146 = vmatprep.subr.mxu0 0.0
    %147 = vmatpush1.msra.mxu0 %v122
    %148 = vmatprep.subr.mxu0 0.0
    %149 = vmatpush1.msra.mxu0 %v123
    %150 = vmatprep.subr.mxu0 0.0
    %151 = vmatpush1.msra.mxu0 %v124
    %152 = vmatprep.subr.mxu0 0.0
    %153 = vmatpush1.msra.mxu0 %v125
    %154 = vmatprep.subr.mxu0 0.0
    %155 = vmatpush1.msra.mxu0 0.0
    %156 = vmatprep.subr.mxu0 0.0
    %157 = vmatpush1.msra.mxu0 0.0
    %158 = vmatprep.subr.mxu0 0.0
    %159 = vmatpush1.msra.mxu0 0.0
    %160 = vmatprep.subr.mxu0 0.0
    %161 = vmatpush1.msra.mxu0 0.0
    %162 = vmatprep.subr.mxu0 0.0
    %163 = vmatpush1.msra.mxu0 0.0
    %164 = vmatprep.subr.mxu0 0.0
    %165 = vmatpush1.msra.mxu0 0.0
    %166 = vmatprep.subr.mxu0 0.0
    %167 = vmatpush1.msra.mxu0 0.0
    %168 = vmatprep.subr.mxu0 0.0
    %169 = vmatpush1.msra.mxu0 0.0
    %170 = vmatprep.subr.mxu0 0.0
    %171 = vmatpush1.msra.mxu0 0.0
    %172 = vmatprep.subr.mxu0 0.0
    %173 = vmatpush1.msra.mxu0 0.0
    %174 = vmatprep.subr.mxu0 0.0
    %175 = vmatpush1.msra.mxu0 0.0
    %176 = vmatprep.subr.mxu0 0.0
    %177 = vmatpush1.msra.mxu0 0.0
    %178 = vmatprep.subr.mxu0 0.0
    %179 = vmatpush1.msra.mxu0 0.0
    %180 = vmatprep.subr.mxu0 0.0
    %181 = vmatpush1.msra.mxu0 0.0
    %182 = vmatprep.subr.mxu0 0.0
    %183 = vmatpush1.msra.mxu0 0.0
    %184 = vmatprep.subr.mxu0 0.0
    %185 = vmatpush1.msra.mxu0 0.0
    %186 = vmatprep.subr.mxu0 0.0
    %187 = vmatpush1.msra.mxu0 0.0
    %188 = vmatprep.subr.mxu0 0.0
    %189 = vmatpush1.msra.mxu0 0.0
    %190 = vmatprep.subr.mxu0 0.0
    %191 = vmatpush1.msra.mxu0 0.0
    %192 = vmatprep.subr.mxu0 0.0
    %193 = vmatpush1.msra.mxu0 0.0
    %194 = vmatprep.subr.mxu0 0.0
    %195 = vmatpush1.msra.mxu0 0.0
    %196 = vmatprep.subr.mxu0 0.0
    %197 = vmatpush1.msra.mxu0 0.0
    %198 = vmatprep.subr.mxu0 0.0
    %199 = vmatpush1.msra.mxu0 0.0
    %200 = vmatprep.subr.mxu0 0.0
    %201 = vmatpush1.msra.mxu0 0.0
    %202 = vmatprep.mubr.f32.mxu0 0.0
    %203 = vmatmul.mubr.f32.gmra.mrb[0].mxu0 %v127
    %v204 = vpop.f32.mrb[0].mxu0
    %v205 = vadd.f32 0.0, %v204
    %v206 = vpop.f32.mrb[0].mxu0
    %207 = vmatprep.mubr.f32.mxu0 0.0
    %208 = vmatmul.mubr.f32.gmra.mrb[0].mxu0 %v130
    %v209 = vpop.f32.mrb[0].mxu0
    %v210 = vadd.f32 0.0, %v209
    %v211 = vpop.f32.mrb[0].mxu0
    %212 = vmatprep.mubr.f32.mxu0 0.0
    %213 = vmatmul.mubr.f32.gmra.mrb[0].mxu0 %v133
    %v214 = vpop.f32.mrb[0].mxu0
    %v215 = vadd.f32 0.0, %v214
    %v216 = vpop.f32.mrb[0].mxu0
    %217 = vmatprep.mubr.f32.mxu0 0.0
    %218 = vmatmul.mubr.f32.gmra.mrb[0].mxu0 %v136
    %v219 = vpop.f32.mrb[0].mxu0
    %v220 = vadd.f32 0.0, %v219
    %v221 = vpop.f32.mrb[0].mxu0
    %222 = vdwg.mxu0
    %v224 = vsel %vm85, %v101, 0
    %v227 = vsel %vm85, %v102, 0
    %v230 = vsel %vm85, %v103, 0
    %v233 = vsel %vm85, %v104, 0
    %235 = vmatprep.subr.mxu0 0.0
    %236 = vmatpush1.msra.mxu0 %v105
    %237 = vmatprep.subr.mxu0 0.0
    %238 = vmatpush1.msra.mxu0 %v106
    %239 = vmatprep.subr.mxu0 0.0
    %240 = vmatpush1.msra.mxu0 %v107
    %241 = vmatprep.subr.mxu0 0.0
    %242 = vmatpush1.msra.mxu0 %v108
    %243 = vmatprep.subr.mxu0 0.0
    %244 = vmatpush1.msra.mxu0 %v109
    %245 = vmatprep.subr.mxu0 0.0
    %246 = vmatpush1.msra.mxu0 %v110
    %247 = vmatprep.subr.mxu0 0.0
    %248 = vmatpush1.msra.mxu0 %v111
    %249 = vmatprep.subr.mxu0 0.0
    %250 = vmatpush1.msra.mxu0 %v112
    %251 = vmatprep.subr.mxu0 0.0
    %252 = vmatpush1.msra.mxu0 0.0
    %253 = vmatprep.subr.mxu0 0.0
    %254 = vmatpush1.msra.mxu0 0.0
    %255 = vmatprep.subr.mxu0 0.0
    %256 = vmatpush1.msra.mxu0 0.0
    %257 = vmatprep.subr.mxu0 0.0
    %258 = vmatpush1.msra.mxu0 0.0
    %259 = vmatprep.subr.mxu0 0.0
    %260 = vmatpush1.msra.mxu0 0.0
    %261 = vmatprep.subr.mxu0 0.0
    %262 = vmatpush1.msra.mxu0 0.0
    %263 = vmatprep.subr.mxu0 0.0
    %264 = vmatpush1.msra.mxu0 0.0
    %265 = vmatprep.subr.mxu0 0.0
    %266 = vmatpush1.msra.mxu0 0.0
    %267 = vmatprep.subr.mxu0 0.0
    %268 = vmatpush1.msra.mxu0 0.0
    %269 = vmatprep.subr.mxu0 0.0
    %270 = vmatpush1.msra.mxu0 0.0
    %271 = vmatprep.subr.mxu0 0.0
    %272 = vmatpush1.msra.mxu0 0.0
    %273 = vmatprep.subr.mxu0 0.0
    %274 = vmatpush1.msra.mxu0 0.0
    %275 = vmatprep.subr.mxu0 0.0
    %276 = vmatpush1.msra.mxu0 0.0
    %277 = vmatprep.subr.mxu0 0.0
    %278 = vmatpush1.msra.mxu0 0.0
    %279 = vmatprep.subr.mxu0 0.0
    %280 = vmatpush1.msra.mxu0 0.0
    %281 = vmatprep.subr.mxu0 0.0
    %282 = vmatpush1.msra.mxu0 0.0
    %283 = vmatprep.subr.mxu0 0.0
    %284 = vmatpush1.msra.mxu0 0.0
    %285 = vmatprep.subr.mxu0 0.0
    %286 = vmatpush1.msra.mxu0 0.0
    %287 = vmatprep.subr.mxu0 0.0
    %288 = vmatpush1.msra.mxu0 0.0
    %289 = vmatprep.subr.mxu0 0.0
    %290 = vmatpush1.msra.mxu0 0.0
    %291 = vmatprep.subr.mxu0 0.0
    %292 = vmatpush1.msra.mxu0 0.0
    %293 = vmatprep.subr.mxu0 0.0
    %294 = vmatpush1.msra.mxu0 0.0
    %295 = vmatprep.subr.mxu0 0.0
    %296 = vmatpush1.msra.mxu0 0.0
    %297 = vmatprep.subr.mxu0 0.0
    %298 = vmatpush1.msra.mxu0 0.0
    %299 = vmatprep.mubr.f32.mxu0 0.0
    %300 = vmatmul.mubr.f32.gmra.mrb[0].mxu0 %v224
    %v301 = vpop.f32.mrb[0].mxu0
    %v302 = vadd.f32 %v205, %v301
    %v303 = vpop.f32.mrb[0].mxu0
    %304 = vmatprep.mubr.f32.mxu0 0.0
    %305 = vmatmul.mubr.f32.gmra.mrb[0].mxu0 %v227
    %v306 = vpop.f32.mrb[0].mxu0
    %v307 = vadd.f32 %v210, %v306
    %v308 = vpop.f32.mrb[0].mxu0
    %309 = vmatprep.mubr.f32.mxu0 0.0
    %310 = vmatmul.mubr.f32.gmra.mrb[0].mxu0 %v230
    %v311 = vpop.f32.mrb[0].mxu0
    %v312 = vadd.f32 %v215, %v311
    %v313 = vpop.f32.mrb[0].mxu0
    %314 = vmatprep.mubr.f32.mxu0 0.0
    %315 = vmatmul.mubr.f32.gmra.mrb[0].mxu0 %v233
    %v316 = vpop.f32.mrb[0].mxu0
    %v317 = vadd.f32 %v220, %v316
    %v318 = vpop.f32.mrb[0].mxu0
    %319 = vdwg.mxu0
    %v320 = vld [vmem:[#allocation2 + $0x2] sm:$0xff]
    %v321 = vld [vmem:[#allocation2 + $0xa] sm:$0xff]
    %v322 = vld [vmem:[#allocation2 + $0x1a] sm:$0xff]
    %v323 = vld [vmem:[#allocation2 + $0x22] sm:$0xff]
    %s324 = scalar_lea.vmem [#allocation7], 128
    %v325 = vld [vmem:[%s324] sm:$0xff]
    %v326 = vld [vmem:[%s324 + $0x8] sm:$0xff]
    %v327 = vld [vmem:[%s324 + $0x10] sm:$0xff]
    %v328 = vld [vmem:[%s324 + $0x18] sm:$0xff]
    %v329 = vld [vmem:[%s324 + $0x20] sm:$0xff]
    %v330 = vld [vmem:[%s324 + $0x28] sm:$0xff]
    %v331 = vld [vmem:[%s324 + $0x30] sm:$0xff]
    %v332 = vld [vmem:[%s324 + $0x38] sm:$0xff]
    %v334 = vsel %vm85, %v320, 0
    %v337 = vsel %vm85, %v321, 0
    %v340 = vsel %vm85, %v322, 0
    %v343 = vsel %vm85, %v323, 0
    %345 = vmatprep.subr.mxu0 0.0
    %346 = vmatpush1.msra.mxu0 %v325
    %347 = vmatprep.subr.mxu0 0.0
    %348 = vmatpush1.msra.mxu0 %v326
    %349 = vmatprep.subr.mxu0 0.0
    %350 = vmatpush1.msra.mxu0 %v327
    %351 = vmatprep.subr.mxu0 0.0
    %352 = vmatpush1.msra.mxu0 %v328
    %353 = vmatprep.subr.mxu0 0.0
    %354 = vmatpush1.msra.mxu0 %v329
    %355 = vmatprep.subr.mxu0 0.0
    %356 = vmatpush1.msra.mxu0 %v330
    %357 = vmatprep.subr.mxu0 0.0
    %358 = vmatpush1.msra.mxu0 %v331
    %359 = vmatprep.subr.mxu0 0.0
    %360 = vmatpush1.msra.mxu0 %v332
    %361 = vmatprep.subr.mxu0 0.0
    %362 = vmatpush1.msra.mxu0 0.0
    %363 = vmatprep.subr.mxu0 0.0
    %364 = vmatpush1.msra.mxu0 0.0
    %365 = vmatprep.subr.mxu0 0.0
    %366 = vmatpush1.msra.mxu0 0.0
    %367 = vmatprep.subr.mxu0 0.0
    %368 = vmatpush1.msra.mxu0 0.0
    %369 = vmatprep.subr.mxu0 0.0
    %370 = vmatpush1.msra.mxu0 0.0
    %371 = vmatprep.subr.mxu0 0.0
    %372 = vmatpush1.msra.mxu0 0.0
    %373 = vmatprep.subr.mxu0 0.0
    %374 = vmatpush1.msra.mxu0 0.0
    %375 = vmatprep.subr.mxu0 0.0
    %376 = vmatpush1.msra.mxu0 0.0
    %377 = vmatprep.subr.mxu0 0.0
    %378 = vmatpush1.msra.mxu0 0.0
    %379 = vmatprep.subr.mxu0 0.0
    %380 = vmatpush1.msra.mxu0 0.0
    %381 = vmatprep.subr.mxu0 0.0
    %382 = vmatpush1.msra.mxu0 0.0
    %383 = vmatprep.subr.mxu0 0.0
    %384 = vmatpush1.msra.mxu0 0.0
    %385 = vmatprep.subr.mxu0 0.0
    %386 = vmatpush1.msra.mxu0 0.0
    %387 = vmatprep.subr.mxu0 0.0
    %388 = vmatpush1.msra.mxu0 0.0
    %389 = vmatprep.subr.mxu0 0.0
    %390 = vmatpush1.msra.mxu0 0.0
    %391 = vmatprep.subr.mxu0 0.0
    %392 = vmatpush1.msra.mxu0 0.0
    %393 = vmatprep.subr.mxu0 0.0
    %394 = vmatpush1.msra.mxu0 0.0
    %395 = vmatprep.subr.mxu0 0.0
    %396 = vmatpush1.msra.mxu0 0.0
    %397 = vmatprep.subr.mxu0 0.0
    %398 = vmatpush1.msra.mxu0 0.0
    %399 = vmatprep.subr.mxu0 0.0
    %400 = vmatpush1.msra.mxu0 0.0
    %401 = vmatprep.subr.mxu0 0.0
    %402 = vmatpush1.msra.mxu0 0.0
    %403 = vmatprep.subr.mxu0 0.0
    %404 = vmatpush1.msra.mxu0 0.0
    %405 = vmatprep.subr.mxu0 0.0
    %406 = vmatpush1.msra.mxu0 0.0
    %407 = vmatprep.subr.mxu0 0.0
    %408 = vmatpush1.msra.mxu0 0.0
    %409 = vmatprep.mubr.f32.mxu0 0.0
    %410 = vmatmul.mubr.f32.gmra.mrb[0].mxu0 %v334
    %v411 = vpop.f32.mrb[0].mxu0
    %v412 = vadd.f32 0.0, %v411
    %v413 = vpop.f32.mrb[0].mxu0
    %414 = vmatprep.mubr.f32.mxu0 0.0
    %415 = vmatmul.mubr.f32.gmra.mrb[0].mxu0 %v337
    %v416 = vpop.f32.mrb[0].mxu0
    %v417 = vadd.f32 0.0, %v416
    %v418 = vpop.f32.mrb[0].mxu0
    %419 = vmatprep.mubr.f32.mxu0 0.0
    %420 = vmatmul.mubr.f32.gmra.mrb[0].mxu0 %v340
    %v421 = vpop.f32.mrb[0].mxu0
    %v422 = vadd.f32 0.0, %v421
    %v423 = vpop.f32.mrb[0].mxu0
    %424 = vmatprep.mubr.f32.mxu0 0.0
    %425 = vmatmul.mubr.f32.gmra.mrb[0].mxu0 %v343
    %v426 = vpop.f32.mrb[0].mxu0
    %v427 = vadd.f32 0.0, %v426
    %v428 = vpop.f32.mrb[0].mxu0
    %429 = vdwg.mxu0
    %v430 = vadd.f32 %v302, %v412
    %v431 = vadd.f32 %v307, %v417
    %v432 = vadd.f32 %v312, %v422
    %v433 = vadd.f32 %v317, %v427
    %v434 = vld [vmem:[#allocation10] sm:$0xff]
    %v435 = vld [vmem:[#allocation10 + $0x8] sm:$0xff]
    %v436 = vld [vmem:[#allocation10 + $0x10] sm:$0xff]
    %v437 = vld [vmem:[#allocation10 + $0x18] sm:$0xff]
    %v438 = vld [vmem:[#allocation10 + $0x20] sm:$0xff]
    %v439 = vld [vmem:[#allocation10 + $0x28] sm:$0xff]
    %v440 = vld [vmem:[#allocation10 + $0x30] sm:$0xff]
    %v441 = vld [vmem:[#allocation10 + $0x38] sm:$0xff]
    %v442 = vld [vmem:[#allocation10 + $0x40] sm:$0xff]
    %v443 = vld [vmem:[#allocation10 + $0x48] sm:$0xff]
    %v444 = vld [vmem:[#allocation10 + $0x50] sm:$0xff]
    %v445 = vld [vmem:[#allocation10 + $0x58] sm:$0xff]
    %v446 = vld [vmem:[#allocation10 + $0x60] sm:$0xff]
    %v447 = vld [vmem:[#allocation10 + $0x68] sm:$0xff]
    %v448 = vld [vmem:[#allocation10 + $0x70] sm:$0xff]
    %v449 = vld [vmem:[#allocation10 + $0x78] sm:$0xff]
    %450 = vmatprep.subr.mxu0 0.0
    %451 = vmatpush1.msra.mxu0 %v434
    %452 = vmatprep.subr.mxu0 0.0
    %453 = vmatpush1.msra.mxu0 %v435
    %454 = vmatprep.subr.mxu0 0.0
    %455 = vmatpush1.msra.mxu0 %v436
    %456 = vmatprep.subr.mxu0 0.0
    %457 = vmatpush1.msra.mxu0 %v437
    %458 = vmatprep.subr.mxu0 0.0
    %459 = vmatpush1.msra.mxu0 %v438
    %460 = vmatprep.subr.mxu0 0.0
    %461 = vmatpush1.msra.mxu0 %v439
    %462 = vmatprep.subr.mxu0 0.0
    %463 = vmatpush1.msra.mxu0 %v440
    %464 = vmatprep.subr.mxu0 0.0
    %465 = vmatpush1.msra.mxu0 %v441
    %466 = vmatprep.subr.mxu0 0.0
    %467 = vmatpush1.msra.mxu0 %v442
    %468 = vmatprep.subr.mxu0 0.0
    %469 = vmatpush1.msra.mxu0 %v443
    %470 = vmatprep.subr.mxu0 0.0
    %471 = vmatpush1.msra.mxu0 %v444
    %472 = vmatprep.subr.mxu0 0.0
    %473 = vmatpush1.msra.mxu0 %v445
    %474 = vmatprep.subr.mxu0 0.0
    %475 = vmatpush1.msra.mxu0 %v446
    %476 = vmatprep.subr.mxu0 0.0
    %477 = vmatpush1.msra.mxu0 %v447
    %478 = vmatprep.subr.mxu0 0.0
    %479 = vmatpush1.msra.mxu0 %v448
    %480 = vmatprep.subr.mxu0 0.0
    %481 = vmatpush1.msra.mxu0 %v449
    %482 = vmatprep.subr.mxu0 0.0
    %483 = vmatpush1.msra.mxu0 0.0
    %484 = vmatprep.subr.mxu0 0.0
    %485 = vmatpush1.msra.mxu0 0.0
    %486 = vmatprep.subr.mxu0 0.0
    %487 = vmatpush1.msra.mxu0 0.0
    %488 = vmatprep.subr.mxu0 0.0
    %489 = vmatpush1.msra.mxu0 0.0
    %490 = vmatprep.subr.mxu0 0.0
    %491 = vmatpush1.msra.mxu0 0.0
    %492 = vmatprep.subr.mxu0 0.0
    %493 = vmatpush1.msra.mxu0 0.0
    %494 = vmatprep.subr.mxu0 0.0
    %495 = vmatpush1.msra.mxu0 0.0
    %496 = vmatprep.subr.mxu0 0.0
    %497 = vmatpush1.msra.mxu0 0.0
    %498 = vmatprep.subr.mxu0 0.0
    %499 = vmatpush1.msra.mxu0 0.0
    %500 = vmatprep.subr.mxu0 0.0
    %501 = vmatpush1.msra.mxu0 0.0
    %502 = vmatprep.subr.mxu0 0.0
    %503 = vmatpush1.msra.mxu0 0.0
    %504 = vmatprep.subr.mxu0 0.0
    %505 = vmatpush1.msra.mxu0 0.0
    %506 = vmatprep.subr.mxu0 0.0
    %507 = vmatpush1.msra.mxu0 0.0
    %508 = vmatprep.subr.mxu0 0.0
    %509 = vmatpush1.msra.mxu0 0.0
    %510 = vmatprep.subr.mxu0 0.0
    %511 = vmatpush1.msra.mxu0 0.0
    %512 = vmatprep.subr.mxu0 0.0
    %513 = vmatpush1.msra.mxu0 0.0
    %514 = vmatprep.mubr.f32.mxu0 0.0
    %515 = vmatmul.mubr.f32.gmra.mrb[0].mxu0 %v430
    %v516 = vpop.f32.mrb[0].mxu0
    %v517 = vadd.f32 0.0, %v516
    %v518 = vpop.f32.mrb[0].mxu0
    %519 = vmatprep.mubr.f32.mxu0 0.0
    %520 = vmatmul.mubr.f32.gmra.mrb[0].mxu0 %v431
    %v521 = vpop.f32.mrb[0].mxu0
    %v522 = vadd.f32 0.0, %v521
    %v523 = vpop.f32.mrb[0].mxu0
    %524 = vmatprep.mubr.f32.mxu0 0.0
    %525 = vmatmul.mubr.f32.gmra.mrb[0].mxu0 %v432
    %v526 = vpop.f32.mrb[0].mxu0
    %v527 = vadd.f32 0.0, %v526
    %v528 = vpop.f32.mrb[0].mxu0
    %529 = vmatprep.mubr.f32.mxu0 0.0
    %530 = vmatmul.mubr.f32.gmra.mrb[0].mxu0 %v433
    %v531 = vpop.f32.mrb[0].mxu0
    %v532 = vadd.f32 0.0, %v531
    %v533 = vpop.f32.mrb[0].mxu0
    %534 = vdwg.mxu0
    %v535 = vadd.f32 %v517, %v522
    %v536 = vadd.f32 %v535, %v527
    %v537 = vadd.f32 %v536, %v532
    %v538 = vrot.slane %v537, 4
    %v539 = vadd.f32 %v537, %v538
    %v540 = vrot.slane %v539, 2
    %v541 = vadd.f32 %v539, %v540
    %v542 = vrot.slane %v541, 1
    %v543 = vadd.f32 %v541, %v542
    %v544 = vmul.f32 %v543, 0.001953125
    %v545 = vmul.f32 %v430, %v430
    %v546 = vmul.f32 %v431, %v431
    %v547 = vmul.f32 %v432, %v432
    %v548 = vmul.f32 %v433, %v433
    %549 = vmatprep.subr.mxu0 0.0
    %550 = vmatpush1.msra.mxu0 %v434
    %551 = vmatprep.subr.mxu0 0.0
    %552 = vmatpush1.msra.mxu0 %v435
    %553 = vmatprep.subr.mxu0 0.0
    %554 = vmatpush1.msra.mxu0 %v436
    %555 = vmatprep.subr.mxu0 0.0
    %556 = vmatpush1.msra.mxu0 %v437
    %557 = vmatprep.subr.mxu0 0.0
    %558 = vmatpush1.msra.mxu0 %v438
    %559 = vmatprep.subr.mxu0 0.0
    %560 = vmatpush1.msra.mxu0 %v439
    %561 = vmatprep.subr.mxu0 0.0
    %562 = vmatpush1.msra.mxu0 %v440
    %563 = vmatprep.subr.mxu0 0.0
    %564 = vmatpush1.msra.mxu0 %v441
    %565 = vmatprep.subr.mxu0 0.0
    %566 = vmatpush1.msra.mxu0 %v442
    %567 = vmatprep.subr.mxu0 0.0
    %568 = vmatpush1.msra.mxu0 %v443
    %569 = vmatprep.subr.mxu0 0.0
    %570 = vmatpush1.msra.mxu0 %v444
    %571 = vmatprep.subr.mxu0 0.0
    %572 = vmatpush1.msra.mxu0 %v445
    %573 = vmatprep.subr.mxu0 0.0
    %574 = vmatpush1.msra.mxu0 %v446
    %575 = vmatprep.subr.mxu0 0.0
    %576 = vmatpush1.msra.mxu0 %v447
    %577 = vmatprep.subr.mxu0 0.0
    %578 = vmatpush1.msra.mxu0 %v448
    %579 = vmatprep.subr.mxu0 0.0
    %580 = vmatpush1.msra.mxu0 %v449
    %581 = vmatprep.subr.mxu0 0.0
    %582 = vmatpush1.msra.mxu0 0.0
    %583 = vmatprep.subr.mxu0 0.0
    %584 = vmatpush1.msra.mxu0 0.0
    %585 = vmatprep.subr.mxu0 0.0
    %586 = vmatpush1.msra.mxu0 0.0
    %587 = vmatprep.subr.mxu0 0.0
    %588 = vmatpush1.msra.mxu0 0.0
    %589 = vmatprep.subr.mxu0 0.0
    %590 = vmatpush1.msra.mxu0 0.0
    %591 = vmatprep.subr.mxu0 0.0
    %592 = vmatpush1.msra.mxu0 0.0
    %593 = vmatprep.subr.mxu0 0.0
    %594 = vmatpush1.msra.mxu0 0.0
    %595 = vmatprep.subr.mxu0 0.0
    %596 = vmatpush1.msra.mxu0 0.0
    %597 = vmatprep.subr.mxu0 0.0
    %598 = vmatpush1.msra.mxu0 0.0
    %599 = vmatprep.subr.mxu0 0.0
    %600 = vmatpush1.msra.mxu0 0.0
    %601 = vmatprep.subr.mxu0 0.0
    %602 = vmatpush1.msra.mxu0 0.0
    %603 = vmatprep.subr.mxu0 0.0
    %604 = vmatpush1.msra.mxu0 0.0
    %605 = vmatprep.subr.mxu0 0.0
    %606 = vmatpush1.msra.mxu0 0.0
    %607 = vmatprep.subr.mxu0 0.0
    %608 = vmatpush1.msra.mxu0 0.0
    %609 = vmatprep.subr.mxu0 0.0
    %610 = vmatpush1.msra.mxu0 0.0
    %611 = vmatprep.subr.mxu0 0.0
    %612 = vmatpush1.msra.mxu0 0.0
    %613 = vmatprep.mubr.f32.mxu0 0.0
    %614 = vmatmul.mubr.f32.gmra.mrb[0].mxu0 %v545
    %v615 = vpop.f32.mrb[0].mxu0
    %v616 = vadd.f32 0.0, %v615
    %v617 = vpop.f32.mrb[0].mxu0
    %618 = vmatprep.mubr.f32.mxu0 0.0
    %619 = vmatmul.mubr.f32.gmra.mrb[0].mxu0 %v546
    %v620 = vpop.f32.mrb[0].mxu0
    %v621 = vadd.f32 0.0, %v620
    %v622 = vpop.f32.mrb[0].mxu0
    %623 = vmatprep.mubr.f32.mxu0 0.0
    %624 = vmatmul.mubr.f32.gmra.mrb[0].mxu0 %v547
    %v625 = vpop.f32.mrb[0].mxu0
    %v626 = vadd.f32 0.0, %v625
    %v627 = vpop.f32.mrb[0].mxu0
    %628 = vmatprep.mubr.f32.mxu0 0.0
    %629 = vmatmul.mubr.f32.gmra.mrb[0].mxu0 %v548
    %v630 = vpop.f32.mrb[0].mxu0
    %v631 = vadd.f32 0.0, %v630
    %v632 = vpop.f32.mrb[0].mxu0
    %633 = vdwg.mxu0
    %v634 = vadd.f32 %v616, %v621
    %v635 = vadd.f32 %v634, %v626
    %v636 = vadd.f32 %v635, %v631
    %v637 = vrot.slane %v636, 4
    %v638 = vadd.f32 %v636, %v637
    %v639 = vrot.slane %v638, 2
    %v640 = vadd.f32 %v638, %v639
    %v641 = vrot.slane %v640, 1
    %v642 = vadd.f32 %v640, %v641
    %v643 = vmul.f32 %v642, 0.001953125
    %v644 = vld [vmem:[%s3] sm:$0x1]
    %v645 = vmul.f32 %v544, %v544
    %v646 = vsub.f32 %v643, %v645
    %v647 = vadd.f32 %v646, 1e-05
    %v648 = vrsqrt.pop %v647
    %v649 = vmul.f32 %v644, %v648
    %v650 = vld [vmem:[%s4] sm:$0x1]
    %v651 = vmul.f32 %v544, %v649
    %v652 = vsub.f32 %v650, %v651
    %v654 = vlaneseq
    %v655 = vshrl.u32 %v654, 7
    %v656 = vsub.s32 0, %v655
    %v657 = vrot.slane %v649, %v656
    %v659 = vmul.f32 %v430, %v657
    %v660 = vmul.f32 %v431, %v657
    %v661 = vmul.f32 %v432, %v657
    %v662 = vmul.f32 %v433, %v657
    %v664 = vlaneseq
    %v665 = vshrl.u32 %v664, 7
    %v666 = vsub.s32 0, %v665
    %v667 = vrot.slane %v652, %v666
    %v669 = vadd.f32 %v659, %v667
    %v670 = vadd.f32 %v660, %v667
    %v671 = vadd.f32 %v661, %v667
    %v672 = vadd.f32 %v662, %v667
    %v673 = vmax.f32 %v669, 0.0
    %v674 = vmax.f32 %v670, 0.0
    %v675 = vmax.f32 %v671, 0.0
    %v676 = vmax.f32 %v672, 0.0
    %677 = vst [vmem:[#allocation3] sm:$0xff] 0.0
    %678 = vst [vmem:[#allocation3 + $0x8] sm:$0xff] 0.0
    %679 = vst [vmem:[#allocation3 + $0x10] sm:$0x3] 0.0
    %680 = vst [vmem:[#allocation3 + $0x18] sm:$0xff] 0.0
    %681 = vst [vmem:[#allocation3 + $0x20] sm:$0xff] 0.0
    %682 = vst [vmem:[#allocation3 + $0x28] sm:$0x3] 0.0
    %683 = vst [vmem:[#allocation3 + $0x1] sm:$0xff] %v673
    %684 = vst [vmem:[#allocation3 + $0x9] sm:$0xff] %v674
    %685 = vst [vmem:[#allocation3 + $0x19] sm:$0xff] %v675
    %686 = vst [vmem:[#allocation3 + $0x21] sm:$0xff] %v676
    %v687 = vld [vmem:[#allocation3] sm:$0xff]
    %v688 = vld [vmem:[#allocation3 + $0x8] sm:$0xff]
    %v689 = vld [vmem:[#allocation3 + $0x18] sm:$0xff]
    %v690 = vld [vmem:[#allocation3 + $0x20] sm:$0xff]
    %v691 = vld [vmem:[#allocation9] sm:$0xff]
    %v692 = vld [vmem:[#allocation9 + $0x8] sm:$0xff]
    %v693 = vld [vmem:[#allocation9 + $0x10] sm:$0xff]
    %v694 = vld [vmem:[#allocation9 + $0x18] sm:$0xff]
    %v695 = vld [vmem:[#allocation9 + $0x20] sm:$0xff]
    %v696 = vld [vmem:[#allocation9 + $0x28] sm:$0xff]
    %v697 = vld [vmem:[#allocation9 + $0x30] sm:$0xff]
    %v698 = vld [vmem:[#allocation9 + $0x38] sm:$0xff]
    %v699 = vld [vmem:[#allocation9 + $0x40] sm:$0xff]
    %v700 = vld [vmem:[#allocation9 + $0x48] sm:$0xff]
    %v701 = vld [vmem:[#allocation9 + $0x50] sm:$0xff]
    %v702 = vld [vmem:[#allocation9 + $0x58] sm:$0xff]
    %v703 = vld [vmem:[#allocation9 + $0x60] sm:$0xff]
    %v704 = vld [vmem:[#allocation9 + $0x68] sm:$0xff]
    %v705 = vld [vmem:[#allocation9 + $0x70] sm:$0xff]
    %v706 = vld [vmem:[#allocation9 + $0x78] sm:$0xff]
    %v707 = vld [vmem:[#allocation3 + $0x1] sm:$0xff]
    %v708 = vld [vmem:[#allocation3 + $0x9] sm:$0xff]
    %v709 = vld [vmem:[#allocation3 + $0x19] sm:$0xff]
    %v710 = vld [vmem:[#allocation3 + $0x21] sm:$0xff]
    %s711 = scalar_lea.vmem [#allocation9], 128
    %v712 = vld [vmem:[%s711] sm:$0xff]
    %v713 = vld [vmem:[%s711 + $0x8] sm:$0xff]
    %v714 = vld [vmem:[%s711 + $0x10] sm:$0xff]
    %v715 = vld [vmem:[%s711 + $0x18] sm:$0xff]
    %v716 = vld [vmem:[%s711 + $0x20] sm:$0xff]
    %v717 = vld [vmem:[%s711 + $0x28] sm:$0xff]
    %v718 = vld [vmem:[%s711 + $0x30] sm:$0xff]
    %v719 = vld [vmem:[%s711 + $0x38] sm:$0xff]
    %v720 = vld [vmem:[%s711 + $0x40] sm:$0xff]
    %v721 = vld [vmem:[%s711 + $0x48] sm:$0xff]
    %v722 = vld [vmem:[%s711 + $0x50] sm:$0xff]
    %v723 = vld [vmem:[%s711 + $0x58] sm:$0xff]
    %v724 = vld [vmem:[%s711 + $0x60] sm:$0xff]
    %v725 = vld [vmem:[%s711 + $0x68] sm:$0xff]
    %v726 = vld [vmem:[%s711 + $0x70] sm:$0xff]
    %v727 = vld [vmem:[%s711 + $0x78] sm:$0xff]
    %728 = vmatprep.subr.mxu0 0.0
    %729 = vmatpush1.msra.mxu0 %v712
    %730 = vmatprep.subr.mxu0 0.0
    %731 = vmatpush1.msra.mxu0 %v713
    %732 = vmatprep.subr.mxu0 0.0
    %733 = vmatpush1.msra.mxu0 %v714
    %734 = vmatprep.subr.mxu0 0.0
    %735 = vmatpush1.msra.mxu0 %v715
    %736 = vmatprep.subr.mxu0 0.0
    %737 = vmatpush1.msra.mxu0 %v716
    %738 = vmatprep.subr.mxu0 0.0
    %739 = vmatpush1.msra.mxu0 %v717
    %740 = vmatprep.subr.mxu0 0.0
    %741 = vmatpush1.msra.mxu0 %v718
    %742 = vmatprep.subr.mxu0 0.0
    %743 = vmatpush1.msra.mxu0 %v719
    %744 = vmatprep.subr.mxu0 0.0
    %745 = vmatpush1.msra.mxu0 %v720
    %746 = vmatprep.subr.mxu0 0.0
    %747 = vmatpush1.msra.mxu0 %v721
    %748 = vmatprep.subr.mxu0 0.0
    %749 = vmatpush1.msra.mxu0 %v722
    %750 = vmatprep.subr.mxu0 0.0
    %751 = vmatpush1.msra.mxu0 %v723
    %752 = vmatprep.subr.mxu0 0.0
    %753 = vmatpush1.msra.mxu0 %v724
    %754 = vmatprep.subr.mxu0 0.0
    %755 = vmatpush1.msra.mxu0 %v725
    %756 = vmatprep.subr.mxu0 0.0
    %757 = vmatpush1.msra.mxu0 %v726
    %758 = vmatprep.subr.mxu0 0.0
    %759 = vmatpush1.msra.mxu0 %v727
    %760 = vmatprep.subr.mxu0 0.0
    %761 = vmatpush1.msra.mxu0 0.0
    %762 = vmatprep.subr.mxu0 0.0
    %763 = vmatpush1.msra.mxu0 0.0
    %764 = vmatprep.subr.mxu0 0.0
    %765 = vmatpush1.msra.mxu0 0.0
    %766 = vmatprep.subr.mxu0 0.0
    %767 = vmatpush1.msra.mxu0 0.0
    %768 = vmatprep.subr.mxu0 0.0
    %769 = vmatpush1.msra.mxu0 0.0
    %770 = vmatprep.subr.mxu0 0.0
    %771 = vmatpush1.msra.mxu0 0.0
    %772 = vmatprep.subr.mxu0 0.0
    %773 = vmatpush1.msra.mxu0 0.0
    %774 = vmatprep.subr.mxu0 0.0
    %775 = vmatpush1.msra.mxu0 0.0
    %776 = vmatprep.subr.mxu0 0.0
    %777 = vmatpush1.msra.mxu0 0.0
    %778 = vmatprep.subr.mxu0 0.0
    %779 = vmatpush1.msra.mxu0 0.0
    %780 = vmatprep.subr.mxu0 0.0
    %781 = vmatpush1.msra.mxu0 0.0
    %782 = vmatprep.subr.mxu0 0.0
    %783 = vmatpush1.msra.mxu0 0.0
    %784 = vmatprep.subr.mxu0 0.0
    %785 = vmatpush1.msra.mxu0 0.0
    %786 = vmatprep.subr.mxu0 0.0
    %787 = vmatpush1.msra.mxu0 0.0
    %788 = vmatprep.subr.mxu0 0.0
    %789 = vmatpush1.msra.mxu0 0.0
    %790 = vmatprep.subr.mxu0 0.0
    %791 = vmatpush1.msra.mxu0 0.0
    %792 = vmatprep.mubr.f32.mxu0 0.0
    %793 = vmatmul.mubr.f32.gmra.mrb[0].mxu0 %v707
    %v794 = vpop.f32.mrb[0].mxu0
    %v795 = vadd.f32 0.0, %v794
    %v796 = vpop.f32.mrb[0].mxu0
    %797 = vmatprep.mubr.f32.mxu0 0.0
    %798 = vmatmul.mubr.f32.gmra.mrb[0].mxu0 %v708
    %v799 = vpop.f32.mrb[0].mxu0
    %v800 = vadd.f32 0.0, %v799
    %v801 = vpop.f32.mrb[0].mxu0
    %802 = vmatprep.mubr.f32.mxu0 0.0
    %803 = vmatmul.mubr.f32.gmra.mrb[0].mxu0 %v709
    %v804 = vpop.f32.mrb[0].mxu0
    %v805 = vadd.f32 0.0, %v804
    %v806 = vpop.f32.mrb[0].mxu0
    %807 = vmatprep.mubr.f32.mxu0 0.0
    %808 = vmatmul.mubr.f32.gmra.mrb[0].mxu0 %v710
    %v809 = vpop.f32.mrb[0].mxu0
    %v810 = vadd.f32 0.0, %v809
    %v811 = vpop.f32.mrb[0].mxu0
    %812 = vdwg.mxu0
    %813 = vmatprep.subr.mxu0 0.0
    %814 = vmatpush1.msra.mxu0 %v691
    %815 = vmatprep.subr.mxu0 0.0
    %816 = vmatpush1.msra.mxu0 %v692
    %817 = vmatprep.subr.mxu0 0.0
    %818 = vmatpush1.msra.mxu0 %v693
    %819 = vmatprep.subr.mxu0 0.0
    %820 = vmatpush1.msra.mxu0 %v694
    %821 = vmatprep.subr.mxu0 0.0
    %822 = vmatpush1.msra.mxu0 %v695
    %823 = vmatprep.subr.mxu0 0.0
    %824 = vmatpush1.msra.mxu0 %v696
    %825 = vmatprep.subr.mxu0 0.0
    %826 = vmatpush1.msra.mxu0 %v697
    %827 = vmatprep.subr.mxu0 0.0
    %828 = vmatpush1.msra.mxu0 %v698
    %829 = vmatprep.subr.mxu0 0.0
    %830 = vmatpush1.msra.mxu0 %v699
    %831 = vmatprep.subr.mxu0 0.0
    %832 = vmatpush1.msra.mxu0 %v700
    %833 = vmatprep.subr.mxu0 0.0
    %834 = vmatpush1.msra.mxu0 %v701
    %835 = vmatprep.subr.mxu0 0.0
    %836 = vmatpush1.msra.mxu0 %v702
    %837 = vmatprep.subr.mxu0 0.0
    %838 = vmatpush1.msra.mxu0 %v703
    %839 = vmatprep.subr.mxu0 0.0
    %840 = vmatpush1.msra.mxu0 %v704
    %841 = vmatprep.subr.mxu0 0.0
    %842 = vmatpush1.msra.mxu0 %v705
    %843 = vmatprep.subr.mxu0 0.0
    %844 = vmatpush1.msra.mxu0 %v706
    %845 = vmatprep.subr.mxu0 0.0
    %846 = vmatpush1.msra.mxu0 0.0
    %847 = vmatprep.subr.mxu0 0.0
    %848 = vmatpush1.msra.mxu0 0.0
    %849 = vmatprep.subr.mxu0 0.0
    %850 = vmatpush1.msra.mxu0 0.0
    %851 = vmatprep.subr.mxu0 0.0
    %852 = vmatpush1.msra.mxu0 0.0
    %853 = vmatprep.subr.mxu0 0.0
    %854 = vmatpush1.msra.mxu0 0.0
    %855 = vmatprep.subr.mxu0 0.0
    %856 = vmatpush1.msra.mxu0 0.0
    %857 = vmatprep.subr.mxu0 0.0
    %858 = vmatpush1.msra.mxu0 0.0
    %859 = vmatprep.subr.mxu0 0.0
    %860 = vmatpush1.msra.mxu0 0.0
    %861 = vmatprep.subr.mxu0 0.0
    %862 = vmatpush1.msra.mxu0 0.0
    %863 = vmatprep.subr.mxu0 0.0
    %864 = vmatpush1.msra.mxu0 0.0
    %865 = vmatprep.subr.mxu0 0.0
    %866 = vmatpush1.msra.mxu0 0.0
    %867 = vmatprep.subr.mxu0 0.0
    %868 = vmatpush1.msra.mxu0 0.0
    %869 = vmatprep.subr.mxu0 0.0
    %870 = vmatpush1.msra.mxu0 0.0
    %871 = vmatprep.subr.mxu0 0.0
    %872 = vmatpush1.msra.mxu0 0.0
    %873 = vmatprep.subr.mxu0 0.0
    %874 = vmatpush1.msra.mxu0 0.0
    %875 = vmatprep.subr.mxu0 0.0
    %876 = vmatpush1.msra.mxu0 0.0
    %877 = vmatprep.mubr.f32.mxu0 0.0
    %878 = vmatmul.mubr.f32.gmra.mrb[0].mxu0 %v687
    %v879 = vpop.f32.mrb[0].mxu0
    %v880 = vadd.f32 %v795, %v879
    %v881 = vpop.f32.mrb[0].mxu0
    %882 = vmatprep.mubr.f32.mxu0 0.0
    %883 = vmatmul.mubr.f32.gmra.mrb[0].mxu0 %v688
    %v884 = vpop.f32.mrb[0].mxu0
    %v885 = vadd.f32 %v800, %v884
    %v886 = vpop.f32.mrb[0].mxu0
    %887 = vmatprep.mubr.f32.mxu0 0.0
    %888 = vmatmul.mubr.f32.gmra.mrb[0].mxu0 %v689
    %v889 = vpop.f32.mrb[0].mxu0
    %v890 = vadd.f32 %v805, %v889
    %v891 = vpop.f32.mrb[0].mxu0
    %892 = vmatprep.mubr.f32.mxu0 0.0
    %893 = vmatmul.mubr.f32.gmra.mrb[0].mxu0 %v690
    %v894 = vpop.f32.mrb[0].mxu0
    %v895 = vadd.f32 %v810, %v894
    %v896 = vpop.f32.mrb[0].mxu0
    %897 = vdwg.mxu0
    %v898 = vld [vmem:[#allocation3 + $0x2] sm:$0xff]
    %v899 = vld [vmem:[#allocation3 + $0xa] sm:$0xff]
    %v900 = vld [vmem:[#allocation3 + $0x1a] sm:$0xff]
    %v901 = vld [vmem:[#allocation3 + $0x22] sm:$0xff]
    %s902 = scalar_lea.vmem [#allocation9], 256
    %v903 = vld [vmem:[%s902] sm:$0xff]
    %v904 = vld [vmem:[%s902 + $0x8] sm:$0xff]
    %v905 = vld [vmem:[%s902 + $0x10] sm:$0xff]
    %v906 = vld [vmem:[%s902 + $0x18] sm:$0xff]
    %v907 = vld [vmem:[%s902 + $0x20] sm:$0xff]
    %v908 = vld [vmem:[%s902 + $0x28] sm:$0xff]
    %v909 = vld [vmem:[%s902 + $0x30] sm:$0xff]
    %v910 = vld [vmem:[%s902 + $0x38] sm:$0xff]
    %v911 = vld [vmem:[%s902 + $0x40] sm:$0xff]
    %v912 = vld [vmem:[%s902 + $0x48] sm:$0xff]
    %v913 = vld [vmem:[%s902 + $0x50] sm:$0xff]
    %v914 = vld [vmem:[%s902 + $0x58] sm:$0xff]
    %v915 = vld [vmem:[%s902 + $0x60] sm:$0xff]
    %v916 = vld [vmem:[%s902 + $0x68] sm:$0xff]
    %v917 = vld [vmem:[%s902 + $0x70] sm:$0xff]
    %v918 = vld [vmem:[%s902 + $0x78] sm:$0xff]
    %919 = vmatprep.subr.mxu0 0.0
    %920 = vmatpush1.msra.mxu0 %v903
    %921 = vmatprep.subr.mxu0 0.0
    %922 = vmatpush1.msra.mxu0 %v904
    %923 = vmatprep.subr.mxu0 0.0
    %924 = vmatpush1.msra.mxu0 %v905
    %925 = vmatprep.subr.mxu0 0.0
    %926 = vmatpush1.msra.mxu0 %v906
    %927 = vmatprep.subr.mxu0 0.0
    %928 = vmatpush1.msra.mxu0 %v907
    %929 = vmatprep.subr.mxu0 0.0
    %930 = vmatpush1.msra.mxu0 %v908
    %931 = vmatprep.subr.mxu0 0.0
    %932 = vmatpush1.msra.mxu0 %v909
    %933 = vmatprep.subr.mxu0 0.0
    %934 = vmatpush1.msra.mxu0 %v910
    %935 = vmatprep.subr.mxu0 0.0
    %936 = vmatpush1.msra.mxu0 %v911
    %937 = vmatprep.subr.mxu0 0.0
    %938 = vmatpush1.msra.mxu0 %v912
    %939 = vmatprep.subr.mxu0 0.0
    %940 = vmatpush1.msra.mxu0 %v913
    %941 = vmatprep.subr.mxu0 0.0
    %942 = vmatpush1.msra.mxu0 %v914
    %943 = vmatprep.subr.mxu0 0.0
    %944 = vmatpush1.msra.mxu0 %v915
    %945 = vmatprep.subr.mxu0 0.0
    %946 = vmatpush1.msra.mxu0 %v916
    %947 = vmatprep.subr.mxu0 0.0
    %948 = vmatpush1.msra.mxu0 %v917
    %949 = vmatprep.subr.mxu0 0.0
    %950 = vmatpush1.msra.mxu0 %v918
    %951 = vmatprep.subr.mxu0 0.0
    %952 = vmatpush1.msra.mxu0 0.0
    %953 = vmatprep.subr.mxu0 0.0
    %954 = vmatpush1.msra.mxu0 0.0
    %955 = vmatprep.subr.mxu0 0.0
    %956 = vmatpush1.msra.mxu0 0.0
    %957 = vmatprep.subr.mxu0 0.0
    %958 = vmatpush1.msra.mxu0 0.0
    %959 = vmatprep.subr.mxu0 0.0
    %960 = vmatpush1.msra.mxu0 0.0
    %961 = vmatprep.subr.mxu0 0.0
    %962 = vmatpush1.msra.mxu0 0.0
    %963 = vmatprep.subr.mxu0 0.0
    %964 = vmatpush1.msra.mxu0 0.0
    %965 = vmatprep.subr.mxu0 0.0
    %966 = vmatpush1.msra.mxu0 0.0
    %967 = vmatprep.subr.mxu0 0.0
    %968 = vmatpush1.msra.mxu0 0.0
    %969 = vmatprep.subr.mxu0 0.0
    %970 = vmatpush1.msra.mxu0 0.0
    %971 = vmatprep.subr.mxu0 0.0
    %972 = vmatpush1.msra.mxu0 0.0
    %973 = vmatprep.subr.mxu0 0.0
    %974 = vmatpush1.msra.mxu0 0.0
    %975 = vmatprep.subr.mxu0 0.0
    %976 = vmatpush1.msra.mxu0 0.0
    %977 = vmatprep.subr.mxu0 0.0
    %978 = vmatpush1.msra.mxu0 0.0
    %979 = vmatprep.subr.mxu0 0.0
    %980 = vmatpush1.msra.mxu0 0.0
    %981 = vmatprep.subr.mxu0 0.0
    %982 = vmatpush1.msra.mxu0 0.0
    %983 = vmatprep.mubr.f32.mxu0 0.0
    %984 = vmatmul.mubr.f32.gmra.mrb[0].mxu0 %v898
    %v985 = vpop.f32.mrb[0].mxu0
    %v986 = vadd.f32 0.0, %v985
    %v987 = vpop.f32.mrb[0].mxu0
    %988 = vmatprep.mubr.f32.mxu0 0.0
    %989 = vmatmul.mubr.f32.gmra.mrb[0].mxu0 %v899
    %v990 = vpop.f32.mrb[0].mxu0
    %v991 = vadd.f32 0.0, %v990
    %v992 = vpop.f32.mrb[0].mxu0
    %993 = vmatprep.mubr.f32.mxu0 0.0
    %994 = vmatmul.mubr.f32.gmra.mrb[0].mxu0 %v900
    %v995 = vpop.f32.mrb[0].mxu0
    %v996 = vadd.f32 0.0, %v995
    %v997 = vpop.f32.mrb[0].mxu0
    %998 = vmatprep.mubr.f32.mxu0 0.0
    %999 = vmatmul.mubr.f32.gmra.mrb[0].mxu0 %v901
    %v1000 = vpop.f32.mrb[0].mxu0
    %v1001 = vadd.f32 0.0, %v1000
    %v1002 = vpop.f32.mrb[0].mxu0
    %1003 = vdwg.mxu0
    %v1004 = vadd.f32 %v880, %v986
    %v1005 = vadd.f32 %v885, %v991
    %v1006 = vadd.f32 %v890, %v996
    %v1007 = vadd.f32 %v895, %v1001
    %v1008 = vld [vmem:[#allocation10] sm:$0xff]
    %v1009 = vld [vmem:[#allocation10 + $0x8] sm:$0xff]
    %v1010 = vld [vmem:[#allocation10 + $0x10] sm:$0xff]
    %v1011 = vld [vmem:[#allocation10 + $0x18] sm:$0xff]
    %v1012 = vld [vmem:[#allocation10 + $0x20] sm:$0xff]
    %v1013 = vld [vmem:[#allocation10 + $0x28] sm:$0xff]
    %v1014 = vld [vmem:[#allocation10 + $0x30] sm:$0xff]
    %v1015 = vld [vmem:[#allocation10 + $0x38] sm:$0xff]
    %v1016 = vld [vmem:[#allocation10 + $0x40] sm:$0xff]
    %v1017 = vld [vmem:[#allocation10 + $0x48] sm:$0xff]
    %v1018 = vld [vmem:[#allocation10 + $0x50] sm:$0xff]
    %v1019 = vld [vmem:[#allocation10 + $0x58] sm:$0xff]
    %v1020 = vld [vmem:[#allocation10 + $0x60] sm:$0xff]
    %v1021 = vld [vmem:[#allocation10 + $0x68] sm:$0xff]
    %v1022 = vld [vmem:[#allocation10 + $0x70] sm:$0xff]
    %v1023 = vld [vmem:[#allocation10 + $0x78] sm:$0xff]
    %1024 = vmatprep.subr.mxu0 0.0
    %1025 = vmatpush1.msra.mxu0 %v1008
    %1026 = vmatprep.subr.mxu0 0.0
    %1027 = vmatpush1.msra.mxu0 %v1009
    %1028 = vmatprep.subr.mxu0 0.0
    %1029 = vmatpush1.msra.mxu0 %v1010
    %1030 = vmatprep.subr.mxu0 0.0
    %1031 = vmatpush1.msra.mxu0 %v1011
    %1032 = vmatprep.subr.mxu0 0.0
    %1033 = vmatpush1.msra.mxu0 %v1012
    %1034 = vmatprep.subr.mxu0 0.0
    %1035 = vmatpush1.msra.mxu0 %v1013
    %1036 = vmatprep.subr.mxu0 0.0
    %1037 = vmatpush1.msra.mxu0 %v1014
    %1038 = vmatprep.subr.mxu0 0.0
    %1039 = vmatpush1.msra.mxu0 %v1015
    %1040 = vmatprep.subr.mxu0 0.0
    %1041 = vmatpush1.msra.mxu0 %v1016
    %1042 = vmatprep.subr.mxu0 0.0
    %1043 = vmatpush1.msra.mxu0 %v1017
    %1044 = vmatprep.subr.mxu0 0.0
    %1045 = vmatpush1.msra.mxu0 %v1018
    %1046 = vmatprep.subr.mxu0 0.0
    %1047 = vmatpush1.msra.mxu0 %v1019
    %1048 = vmatprep.subr.mxu0 0.0
    %1049 = vmatpush1.msra.mxu0 %v1020
    %1050 = vmatprep.subr.mxu0 0.0
    %1051 = vmatpush1.msra.mxu0 %v1021
    %1052 = vmatprep.subr.mxu0 0.0
    %1053 = vmatpush1.msra.mxu0 %v1022
    %1054 = vmatprep.subr.mxu0 0.0
    %1055 = vmatpush1.msra.mxu0 %v1023
    %1056 = vmatprep.subr.mxu0 0.0
    %1057 = vmatpush1.msra.mxu0 0.0
    %1058 = vmatprep.subr.mxu0 0.0
    %1059 = vmatpush1.msra.mxu0 0.0
    %1060 = vmatprep.subr.mxu0 0.0
    %1061 = vmatpush1.msra.mxu0 0.0
    %1062 = vmatprep.subr.mxu0 0.0
    %1063 = vmatpush1.msra.mxu0 0.0
    %1064 = vmatprep.subr.mxu0 0.0
    %1065 = vmatpush1.msra.mxu0 0.0
    %1066 = vmatprep.subr.mxu0 0.0
    %1067 = vmatpush1.msra.mxu0 0.0
    %1068 = vmatprep.subr.mxu0 0.0
    %1069 = vmatpush1.msra.mxu0 0.0
    %1070 = vmatprep.subr.mxu0 0.0
    %1071 = vmatpush1.msra.mxu0 0.0
    %1072 = vmatprep.subr.mxu0 0.0
    %1073 = vmatpush1.msra.mxu0 0.0
    %1074 = vmatprep.subr.mxu0 0.0
    %1075 = vmatpush1.msra.mxu0 0.0
    %1076 = vmatprep.subr.mxu0 0.0
    %1077 = vmatpush1.msra.mxu0 0.0
    %1078 = vmatprep.subr.mxu0 0.0
    %1079 = vmatpush1.msra.mxu0 0.0
    %1080 = vmatprep.subr.mxu0 0.0
    %1081 = vmatpush1.msra.mxu0 0.0
    %1082 = vmatprep.subr.mxu0 0.0
    %1083 = vmatpush1.msra.mxu0 0.0
    %1084 = vmatprep.subr.mxu0 0.0
    %1085 = vmatpush1.msra.mxu0 0.0
    %1086 = vmatprep.subr.mxu0 0.0
    %1087 = vmatpush1.msra.mxu0 0.0
    %1088 = vmatprep.mubr.f32.mxu0 0.0
    %1089 = vmatmul.mubr.f32.gmra.mrb[0].mxu0 %v1004
    %v1090 = vpop.f32.mrb[0].mxu0
    %v1091 = vadd.f32 0.0, %v1090
    %v1092 = vpop.f32.mrb[0].mxu0
    %1093 = vmatprep.mubr.f32.mxu0 0.0
    %1094 = vmatmul.mubr.f32.gmra.mrb[0].mxu0 %v1005
    %v1095 = vpop.f32.mrb[0].mxu0
    %v1096 = vadd.f32 0.0, %v1095
    %v1097 = vpop.f32.mrb[0].mxu0
    %1098 = vmatprep.mubr.f32.mxu0 0.0
    %1099 = vmatmul.mubr.f32.gmra.mrb[0].mxu0 %v1006
    %v1100 = vpop.f32.mrb[0].mxu0
    %v1101 = vadd.f32 0.0, %v1100
    %v1102 = vpop.f32.mrb[0].mxu0
    %1103 = vmatprep.mubr.f32.mxu0 0.0
    %1104 = vmatmul.mubr.f32.gmra.mrb[0].mxu0 %v1007
    %v1105 = vpop.f32.mrb[0].mxu0
    %v1106 = vadd.f32 0.0, %v1105
    %v1107 = vpop.f32.mrb[0].mxu0
    %1108 = vdwg.mxu0
    %v1109 = vadd.f32 %v1091, %v1096
    %v1110 = vadd.f32 %v1109, %v1101
    %v1111 = vadd.f32 %v1110, %v1106
    %v1112 = vrot.slane %v1111, 4
    %v1113 = vadd.f32 %v1111, %v1112
    %v1114 = vrot.slane %v1113, 2
    %v1115 = vadd.f32 %v1113, %v1114
    %v1116 = vrot.slane %v1115, 1
    %v1117 = vadd.f32 %v1115, %v1116
    %v1118 = vmul.f32 %v1117, 0.001953125
    %v1119 = vmul.f32 %v1004, %v1004
    %v1120 = vmul.f32 %v1005, %v1005
    %v1121 = vmul.f32 %v1006, %v1006
    %v1122 = vmul.f32 %v1007, %v1007
    %1123 = vmatprep.subr.mxu0 0.0
    %1124 = vmatpush1.msra.mxu0 %v1008
    %1125 = vmatprep.subr.mxu0 0.0
    %1126 = vmatpush1.msra.mxu0 %v1009
    %1127 = vmatprep.subr.mxu0 0.0
    %1128 = vmatpush1.msra.mxu0 %v1010
    %1129 = vmatprep.subr.mxu0 0.0
    %1130 = vmatpush1.msra.mxu0 %v1011
    %1131 = vmatprep.subr.mxu0 0.0
    %1132 = vmatpush1.msra.mxu0 %v1012
    %1133 = vmatprep.subr.mxu0 0.0
    %1134 = vmatpush1.msra.mxu0 %v1013
    %1135 = vmatprep.subr.mxu0 0.0
    %1136 = vmatpush1.msra.mxu0 %v1014
    %1137 = vmatprep.subr.mxu0 0.0
    %1138 = vmatpush1.msra.mxu0 %v1015
    %1139 = vmatprep.subr.mxu0 0.0
    %1140 = vmatpush1.msra.mxu0 %v1016
    %1141 = vmatprep.subr.mxu0 0.0
    %1142 = vmatpush1.msra.mxu0 %v1017
    %1143 = vmatprep.subr.mxu0 0.0
    %1144 = vmatpush1.msra.mxu0 %v1018
    %1145 = vmatprep.subr.mxu0 0.0
    %1146 = vmatpush1.msra.mxu0 %v1019
    %1147 = vmatprep.subr.mxu0 0.0
    %1148 = vmatpush1.msra.mxu0 %v1020
    %1149 = vmatprep.subr.mxu0 0.0
    %1150 = vmatpush1.msra.mxu0 %v1021
    %1151 = vmatprep.subr.mxu0 0.0
    %1152 = vmatpush1.msra.mxu0 %v1022
    %1153 = vmatprep.subr.mxu0 0.0
    %1154 = vmatpush1.msra.mxu0 %v1023
    %1155 = vmatprep.subr.mxu0 0.0
    %1156 = vmatpush1.msra.mxu0 0.0
    %1157 = vmatprep.subr.mxu0 0.0
    %1158 = vmatpush1.msra.mxu0 0.0
    %1159 = vmatprep.subr.mxu0 0.0
    %1160 = vmatpush1.msra.mxu0 0.0
    %1161 = vmatprep.subr.mxu0 0.0
    %1162 = vmatpush1.msra.mxu0 0.0
    %1163 = vmatprep.subr.mxu0 0.0
    %1164 = vmatpush1.msra.mxu0 0.0
    %1165 = vmatprep.subr.mxu0 0.0
    %1166 = vmatpush1.msra.mxu0 0.0
    %1167 = vmatprep.subr.mxu0 0.0
    %1168 = vmatpush1.msra.mxu0 0.0
    %1169 = vmatprep.subr.mxu0 0.0
    %1170 = vmatpush1.msra.mxu0 0.0
    %1171 = vmatprep.subr.mxu0 0.0
    %1172 = vmatpush1.msra.mxu0 0.0
    %1173 = vmatprep.subr.mxu0 0.0
    %1174 = vmatpush1.msra.mxu0 0.0
    %1175 = vmatprep.subr.mxu0 0.0
    %1176 = vmatpush1.msra.mxu0 0.0
    %1177 = vmatprep.subr.mxu0 0.0
    %1178 = vmatpush1.msra.mxu0 0.0
    %1179 = vmatprep.subr.mxu0 0.0
    %1180 = vmatpush1.msra.mxu0 0.0
    %1181 = vmatprep.subr.mxu0 0.0
    %1182 = vmatpush1.msra.mxu0 0.0
    %1183 = vmatprep.subr.mxu0 0.0
    %1184 = vmatpush1.msra.mxu0 0.0
    %1185 = vmatprep.subr.mxu0 0.0
    %1186 = vmatpush1.msra.mxu0 0.0
    %1187 = vmatprep.mubr.f32.mxu0 0.0
    %1188 = vmatmul.mubr.f32.gmra.mrb[0].mxu0 %v1119
    %v1189 = vpop.f32.mrb[0].mxu0
    %v1190 = vadd.f32 0.0, %v1189
    %v1191 = vpop.f32.mrb[0].mxu0
    %1192 = vmatprep.mubr.f32.mxu0 0.0
    %1193 = vmatmul.mubr.f32.gmra.mrb[0].mxu0 %v1120
    %v1194 = vpop.f32.mrb[0].mxu0
    %v1195 = vadd.f32 0.0, %v1194
    %v1196 = vpop.f32.mrb[0].mxu0
    %1197 = vmatprep.mubr.f32.mxu0 0.0
    %1198 = vmatmul.mubr.f32.gmra.mrb[0].mxu0 %v1121
    %v1199 = vpop.f32.mrb[0].mxu0
    %v1200 = vadd.f32 0.0, %v1199
    %v1201 = vpop.f32.mrb[0].mxu0
    %1202 = vmatprep.mubr.f32.mxu0 0.0
    %1203 = vmatmul.mubr.f32.gmra.mrb[0].mxu0 %v1122
    %v1204 = vpop.f32.mrb[0].mxu0
    %v1205 = vadd.f32 0.0, %v1204
    %v1206 = vpop.f32.mrb[0].mxu0
    %1207 = vdwg.mxu0
    %v1208 = vadd.f32 %v1190, %v1195
    %v1209 = vadd.f32 %v1208, %v1200
    %v1210 = vadd.f32 %v1209, %v1205
    %v1211 = vrot.slane %v1210, 4
    %v1212 = vadd.f32 %v1210, %v1211
    %v1213 = vrot.slane %v1212, 2
    %v1214 = vadd.f32 %v1212, %v1213
    %v1215 = vrot.slane %v1214, 1
    %v1216 = vadd.f32 %v1214, %v1215
    %v1217 = vmul.f32 %v1216, 0.001953125
    %v1218 = vld [vmem:[%s5] sm:$0x1]
    %v1219 = vmul.f32 %v1118, %v1118
    %v1220 = vsub.f32 %v1217, %v1219
    %v1221 = vadd.f32 %v1220, 1e-05
    %v1222 = vrsqrt.pop %v1221
    %v1223 = vmul.f32 %v1218, %v1222
    %v1224 = vld [vmem:[%s6] sm:$0x1]
    %v1225 = vmul.f32 %v1118, %v1223
    %v1226 = vsub.f32 %v1224, %v1225
    %v1228 = vlaneseq
    %v1229 = vshrl.u32 %v1228, 7
    %v1230 = vsub.s32 0, %v1229
    %v1231 = vrot.slane %v1223, %v1230
    %v1233 = vmul.f32 %v1004, %v1231
    %v1234 = vmul.f32 %v1005, %v1231
    %v1235 = vmul.f32 %v1006, %v1231
    %v1236 = vmul.f32 %v1007, %v1231
    %v1238 = vlaneseq
    %v1239 = vshrl.u32 %v1238, 7
    %v1240 = vsub.s32 0, %v1239
    %v1241 = vrot.slane %v1226, %v1240
    %v1243 = vadd.f32 %v1233, %v1241
    %v1244 = vadd.f32 %v1234, %v1241
    %v1245 = vadd.f32 %v1235, %v1241
    %v1246 = vadd.f32 %v1236, %v1241
    %v1247 = vmax.f32 %v1243, 0.0
    %v1248 = vmax.f32 %v1244, 0.0
    %v1249 = vmax.f32 %v1245, 0.0
    %v1250 = vmax.f32 %v1246, 0.0
    %1251 = vst [vmem:[#allocation12] sm:$0xff] %v1247
    %1252 = vst [vmem:[#allocation12 + $0x8] sm:$0xff] %v1248
    %1253 = vst [vmem:[#allocation12 + $0x10] sm:$0xff] %v1249
    %1254 = vst [vmem:[#allocation12 + $0x18] sm:$0xff] %v1250
    // Predicated region
    $region50: #{tpu_custom_call.1} parent=1 // pred_check
      _
    $region51: #{tpu_custom_call.1} parent=1 // pred_check_branch
      %1256 = sbr.rel (0) target = $region53
    $region52: #{tpu_custom_call.1} parent=1 // pred_region
      %s1258 = ssub.s32 512, 512
      %1259 = vsyncadd [#allocation6], %s1258
      %s1260 = sshll.u32 [#allocation12], 4
      %s1261 = int_to_ptr.vmem [resolvable:$true] %s1260
      %1266 = dma.vmem_to_hbm [thread:$0]  %s1261, 512, %s8, [#allocation6], 128, 128, 8
    $region53: #{tpu_custom_call.1} parent=1 // pred_fallthru
      _
    // Predicated region
    $region54: #{tpu_custom_call.1} parent=1 // pred_check
      _
    $region55: #{tpu_custom_call.1} parent=1 // pred_check_branch
      %1268 = sbr.rel (0) target = $region57
    $region56: #{tpu_custom_call.1} parent=1 // pred_region
      %1269 = dma.done [#allocation6], 512
    $region57: #{tpu_custom_call.1} parent=1 // pred_fallthru
      _
    %1270 = vsyncpa [#allocation5], 1
    %1271 = vsyncpa [#allocation8], 1
    %1272 = vsyncpa [#allocation11], 1
    %1273 = vsyncpa [#allocation6], 1

</llo_original>
